<compile_context>
chip_gen: v7x
topology: tpu7x:2x2x1
jax: 0.10.0
libtpu: 0.0.40
codegen_flags: <defaults>
</compile_context>

<pallas_src>
import functools
import math

import jax
import jax.numpy as jnp
from jax import lax
from jax.experimental import pallas as pl
from jax.experimental.pallas import tpu as pltpu


def _round_up(x, m):
    return (x + m - 1) // m * m


_VMEM_LIMIT = 32 * 1024 * 1024   # leave headroom on v7x's 64 MiB per-TC VMEM


@functools.lru_cache(maxsize=1)
def _max_tn():
    # v5e has a 4x128x128 MXU and lower HBM bandwidth -> prefer TN=128 there.
    try:
        kind = jax.devices()[0].device_kind.lower()
        if 'v5 lite' in kind or 'v5e' in kind or 'v5lite' in kind:
            return 128
    except Exception:
        pass
    return 256


# ---------------------------------------------------------------------------
# Fused matmul kernel:  out = act((A @ B) * scale + shift [+ residual])
# A: (M, K) bf16, B: (K, N) bf16, scale/shift: (1, N) f32, residual: (M, N)
# Optional K reduction grid axis with f32 VMEM accumulator.
# ---------------------------------------------------------------------------
def _fused_mm_kernel(a_ref, b_ref, s_ref, t_ref, o_ref, acc_ref, *, relu):
    k = pl.program_id(2)

    @pl.when(k == 0)
    def _():
        acc_ref[...] = jnp.zeros_like(acc_ref)

    acc_ref[...] += jnp.dot(a_ref[...], b_ref[...],
                            preferred_element_type=jnp.float32)

    @pl.when(k == pl.num_programs(2) - 1)
    def _():
        y = acc_ref[...] * s_ref[...] + t_ref[...]
        if relu:
            y = jnp.maximum(y, 0.0)
        o_ref[...] = y.astype(o_ref.dtype)


def _fused_mm_res_kernel(a_ref, b_ref, s_ref, t_ref, r_ref, o_ref, acc_ref, *, relu):
    k = pl.program_id(2)

    @pl.when(k == 0)
    def _():
        acc_ref[...] = jnp.zeros_like(acc_ref)

    acc_ref[...] += jnp.dot(a_ref[...], b_ref[...],
                            preferred_element_type=jnp.float32)

    @pl.when(k == pl.num_programs(2) - 1)
    def _():
        y = acc_ref[...] * s_ref[...] + t_ref[...] + r_ref[...].astype(jnp.float32)
        if relu:
            y = jnp.maximum(y, 0.0)
        o_ref[...] = y.astype(o_ref.dtype)


def _m_tiling(m):
    if m > 512:
        for t in (512, 256, 128):
            if m % t == 0:
                return m, t
        return _round_up(m, 256), 256
    if m >= 128 and m % 16 == 0:
        return m, m // 2              # >=2 M blocks -> both v7x TensorCores get work
    mp = _round_up(m, 8)
    return mp, mp


def _n_tiling(n):
    tn_max = _max_tn()
    if n <= tn_max:
        return n, n                   # full-extent lane block, no padding
    for t in (tn_max, 128):
        if n % t == 0:
            return n, t
    return _round_up(n, 128), 128


def _k_tiling(k):
    if k > 1536:
        for t in (512, 768, 640, 384, 256):   # multiples of 128 (lane constraint on A)
            if k % t == 0:
                return t
    return k


@functools.partial(jax.jit, static_argnames=('relu', 'out_dtype'))
def fused_matmul(a, b, scale=None, shift=None, residual=None, *,
                 relu=False, out_dtype=jnp.float32):
    """bf16 MXU matmul, f32 accumulation, fused scale/shift/residual/ReLU epilogue."""
    M, K = a.shape
    Kb, N = b.shape
    assert K == Kb
    Mp, TM = _m_tiling(M)
    Np, TN = _n_tiling(N)
    TK = _k_tiling(K)

    a = a.astype(jnp.bfloat16)
    b = b.astype(jnp.bfloat16)
    if Mp != M:
        # TODO(synk): ragged-M tails still pay a jnp.pad HBM copy; ARTrack shapes are 8-aligned.
        a = jnp.pad(a, ((0, Mp - M), (0, 0)))
    if Np != N:
        b = jnp.pad(b, ((0, 0), (0, Np - N)))

    s_row = (jnp.ones((1, Np), jnp.float32) if scale is None
             else jnp.pad(scale.astype(jnp.float32).reshape(1, N), ((0, 0), (0, Np - N))))
    t_row = (jnp.zeros((1, Np), jnp.float32) if shift is None
             else jnp.pad(shift.astype(jnp.float32).reshape(1, N), ((0, 0), (0, Np - N))))

    in_specs = [
        pl.BlockSpec((TM, TK), lambda i, j, k: (i, k)),
        pl.BlockSpec((TK, TN), lambda i, j, k: (k, j)),
        pl.BlockSpec((1, TN), lambda i, j, k: (0, j)),
        pl.BlockSpec((1, TN), lambda i, j, k: (0, j)),
    ]
    args = [a, b, s_row, t_row]
    if residual is not None:
        r = residual
        if Mp != M or Np != N:
            r = jnp.pad(r, ((0, Mp - M), (0, Np - N)))
        in_specs.append(pl.BlockSpec((TM, TN), lambda i, j, k: (i, j)))
        args.append(r)
        kernel = functools.partial(_fused_mm_res_kernel, relu=relu)
    else:
        kernel = functools.partial(_fused_mm_kernel, relu=relu)

    out = pl.pallas_call(
        kernel,
        out_shape=jax.ShapeDtypeStruct((Mp, Np), out_dtype),
        grid_spec=pltpu.PrefetchScalarGridSpec(
            num_scalar_prefetch=0,
            grid=(Mp // TM, Np // TN, K // TK),
            in_specs=in_specs,
            out_specs=pl.BlockSpec((TM, TN), lambda i, j, k: (i, j)),
            scratch_shapes=[pltpu.VMEM((TM, TN), jnp.float32)],
        ),
        compiler_params=pltpu.CompilerParams(
            dimension_semantics=("parallel", "parallel", "arbitrary"),
            vmem_limit_bytes=_VMEM_LIMIT),
    )(*args)
    if Mp != M or Np != N:
        out = out[:M, :N]
    return out


# ---------------------------------------------------------------------------
# Folded 3x3 stride-1 conv kernel: no im2col in HBM.  The padded NHWC plane of
# one image is the input block; the 9 taps are sliced from it in VMEM and
# accumulated in f32; BN scale/shift + ReLU fused into the epilogue.
# ---------------------------------------------------------------------------
def _conv3x3_kernel(x_ref, w_ref, s_ref, t_ref, o_ref, *, relu):
    _, hp, wp, c = x_ref.shape
    ho, wo = hp - 2, wp - 2
    cout = o_ref.shape[-1]
    acc = jnp.zeros((ho * wo, cout), jnp.float32)
    for i in range(3):
        for j in range(3):
            tap = x_ref[0, i:i + ho, j:j + wo, :]            # (ho, wo, c) bf16 window
            a = tap.reshape(ho * wo, c)
            acc = acc + jnp.dot(a, w_ref[i * 3 + j],
                                preferred_element_type=jnp.float32)
    y = acc * s_ref[...] + t_ref[...]
    if relu:
        y = jnp.maximum(y, 0.0)
    o_ref[0] = y.astype(o_ref.dtype)


@functools.partial(jax.jit, static_argnames=('relu', 'out_dtype'))
def _conv3x3_s1_folded(x, w3, scale, shift, *, relu, out_dtype=jnp.bfloat16):
    n, h, w, c = x.shape
    cout = w3.shape[-1]
    xp = jnp.pad(x.astype(jnp.bfloat16), ((0, 0), (1, 1), (1, 1), (0, 0)))
    hp, wp = h + 2, w + 2
    out = pl.pallas_call(
        functools.partial(_conv3x3_kernel, relu=relu),
        out_shape=jax.ShapeDtypeStruct((n, h * w, cout), out_dtype),
        grid_spec=pltpu.PrefetchScalarGridSpec(
            num_scalar_prefetch=0,
            grid=(n,),
            in_specs=[
                pl.BlockSpec((1, hp, wp, c), lambda b: (b, 0, 0, 0)),
                pl.BlockSpec((9, c, cout), lambda b: (0, 0, 0)),
                pl.BlockSpec((1, cout), lambda b: (0, 0)),
                pl.BlockSpec((1, cout), lambda b: (0, 0)),
            ],
            out_specs=pl.BlockSpec((1, h * w, cout), lambda b: (b, 0, 0)),
        ),
        compiler_params=pltpu.CompilerParams(
            dimension_semantics=("parallel",),
            vmem_limit_bytes=_VMEM_LIMIT),
    )(xp, w3, scale.reshape(1, cout), shift.reshape(1, cout))
    return out.reshape(n, h, w, cout)


# ---------------------------------------------------------------------------
# Generic conv (+ folded BN + bias + residual + ReLU) on NHWC bf16 activations.
# Falls back to an im2col gather only for strided / 7x7 / tiny-spatial convs.
# ---------------------------------------------------------------------------
@functools.partial(jax.jit,
                   static_argnames=('kh', 'kw', 'stride', 'pad', 'relu', 'out_dtype'))
def _conv_im2col(x, w, scale, shift, residual=None, *, kh, kw, stride, pad, relu,
                 out_dtype=jnp.bfloat16):
    N, H, W, C = x.shape
    Cout = w.shape[1]
    if kh == 1 and kw == 1:
        if stride != 1:
            x = x[:, ::stride, ::stride, :]
        Ho, Wo = x.shape[1], x.shape[2]
        cols = x.reshape(N * Ho * Wo, C)
    else:
        xp = jnp.pad(x, ((0, 0), (pad, pad), (pad, pad), (0, 0)))
        Hp, Wp = xp.shape[1], xp.shape[2]
        Ho = (Hp - kh) // stride + 1
        Wo = (Wp - kw) // stride + 1
        taps = []
        for i in range(kh):
            for j in range(kw):
                taps.append(lax.slice(
                    xp, (0, i, j, 0),
                    (N, i + (Ho - 1) * stride + 1, j + (Wo - 1) * stride + 1, C),
                    (1, stride, stride, 1)))
        # TODO(synk): strided / 7x7 convs still materialize the tap gather in HBM;
        # the stride-1 3x3 convs (the dominant ones) use the folded kernel above.
        cols = jnp.stack(taps, axis=3).reshape(N * Ho * Wo, kh * kw * C)
    res = None if residual is None else residual.reshape(N * Ho * Wo, Cout)
    out = fused_matmul(cols, w, scale=scale, shift=shift,
                       residual=res, relu=relu, out_dtype=out_dtype)
    return out.reshape(N, Ho, Wo, Cout)


def conv_bn_act(x, cw, residual=None, *, kh, kw, stride, pad, relu,
                out_dtype=jnp.bfloat16):
    N, H, W, C = x.shape
    if ('w3' in cw and kh == 3 and kw == 3 and stride == 1 and pad == 1
            and residual is None and W % 8 == 0
            and (H + 2) * (W + 2) * C * 2 < 8 * 1024 * 1024):
        return _conv3x3_s1_folded(x, cw['w3'], cw['scale'], cw['shift'],
                                  relu=relu, out_dtype=out_dtype)
    return _conv_im2col(x, cw['w'], cw['scale'], cw['shift'], residual,
                        kh=kh, kw=kw, stride=stride, pad=pad, relu=relu,
                        out_dtype=out_dtype)


def maxpool_3x3_s2(x):
    neg = jnp.array(-jnp.inf, dtype=x.dtype)
    return lax.reduce_window(x, neg, lax.max, (1, 3, 3, 1), (1, 2, 2, 1),
                             ((0, 0), (1, 1), (1, 1), (0, 0)))


def bottleneck(x, bp, stride):
    out = conv_bn_act(x, bp['c1'], kh=1, kw=1, stride=1, pad=0, relu=True)
    out = conv_bn_act(out, bp['c2'], kh=3, kw=3, stride=stride, pad=1, relu=True)
    if 'down' in bp:
        identity = conv_bn_act(x, bp['down'], kh=1, kw=1, stride=stride, pad=0, relu=False)
    else:
        identity = x
    return conv_bn_act(out, bp['c3'], identity, kh=1, kw=1, stride=1, pad=0, relu=True)


RESNET50_CFG = [(64, 3, 1), (128, 4, 2), (256, 6, 2), (512, 3, 2)]


def resnet50_features(x, bb):
    x = conv_bn_act(x, bb['stem'], kh=7, kw=7, stride=2, pad=3, relu=True)
    x = maxpool_3x3_s2(x)
    feats = {}
    for li, (_, nblocks, stride0) in enumerate(RESNET50_CFG):
        blocks = bb[f'layer{li + 1}']
        for b in range(nblocks):
            x = bottleneck(x, blocks[b], stride0 if b == 0 else 1)
        feats[f'layer{li + 1}'] = x
    return feats


# ---------------------------------------------------------------------------
# Fully fused transformer encoder layer (post-norm, ReLU, eval-mode dropout):
# QKV proj + per-head attention + out-proj + residual + LN + FFN + residual + LN
# in ONE Pallas kernel, grid over the batch dimension.
# ---------------------------------------------------------------------------
def _encoder_layer_kernel(x_ref, mask_ref, wqkv_ref, bqkv_ref, wo_ref, bo_ref,
                          g1_ref, bln1_ref, w1_ref, bf1_ref, w2_ref, bf2_ref,
                          g2_ref, bln2_ref, o_ref, *, nhead, eps):
    S, E = x_ref.shape
    D = E // nhead
    scale = 1.0 / math.sqrt(D)

    def ln(v, g, b):
        mu = jnp.mean(v, axis=-1, keepdims=True)
        d = v - mu
        var = jnp.mean(d * d, axis=-1, keepdims=True)
        return d * lax.rsqrt(var + eps) * g + b

    x_bf = x_ref[...]                                               # (S, E) bf16
    x32 = x_bf.astype(jnp.float32)
    qkv = jnp.dot(x_bf, wqkv_ref[...],
                  preferred_element_type=jnp.float32) + bqkv_ref[...]   # (S, 3E)
    q = (qkv[:, :E] * scale).astype(jnp.bfloat16)
    k = qkv[:, E:2 * E].astype(jnp.bfloat16)
    v = qkv[:, 2 * E:].astype(jnp.bfloat16)
    mask = mask_ref[...]

    heads = []
    for h in range(nhead):
        q_h = q[:, h * D:(h + 1) * D]
        k_h = k[:, h * D:(h + 1) * D]
        v_h = v[:, h * D:(h + 1) * D]
        s = lax.dot_general(q_h, k_h, (((1,), (1,)), ((), ())),
                            preferred_element_type=jnp.float32) + mask   # (S, S)
        m = jnp.maximum(jnp.max(s, axis=-1, keepdims=True), -1e30)       # NaN guard
        p = jnp.exp(s - m)
        denom = jnp.maximum(jnp.sum(p, axis=-1, keepdims=True), 1e-30)
        p = p * pl.reciprocal(denom, approx=True)
        heads.append(jnp.dot(p.astype(jnp.bfloat16), v_h,
                             preferred_element_type=jnp.float32))        # (S, D)
    attn = jnp.concatenate(heads, axis=1)                                # (S, E) f32

    y = (jnp.dot(attn.astype(jnp.bfloat16), wo_ref[...],
                 preferred_element_type=jnp.float32)
         + bo_ref[...] + x32)                                            # residual
    y = ln(y, g1_ref[...], bln1_ref[...])
    hdn = jnp.dot(y.astype(jnp.bfloat16), w1_ref[...],
                  preferred_element_type=jnp.float32) + bf1_ref[...]
    hdn = jnp.maximum(hdn, 0.0)
    y2 = (jnp.dot(hdn.astype(jnp.bfloat16), w2_ref[...],
                  preferred_element_type=jnp.float32)
          + bf2_ref[...] + y)                                            # residual
    y2 = ln(y2, g2_ref[...], bln2_ref[...])
    o_ref[...] = y2.astype(o_ref.dtype)


@functools.partial(jax.jit, static_argnames=('nhead',))
def transformer_encoder_layer(x_flat, mask, lp, *, nhead):
    """x_flat: (B*S, E) bf16 with per-batch rows contiguous; mask: (S, S) f32."""
    BS, E = x_flat.shape
    S = mask.shape[0]
    B = BS // S
    assert E % nhead == 0

    def rep(shape):
        return pl.BlockSpec(shape, lambda b: tuple(0 for _ in shape))

    return pl.pallas_call(
        functools.partial(_encoder_layer_kernel, nhead=nhead, eps=1e-5),
        out_shape=jax.ShapeDtypeStruct((BS, E), jnp.bfloat16),
        grid_spec=pltpu.PrefetchScalarGridSpec(
            num_scalar_prefetch=0,
            grid=(B,),
            in_specs=[
                pl.BlockSpec((S, E), lambda b: (b, 0)),
                rep(mask.shape),
                rep(lp['in_proj_w'].shape), rep(lp['in_proj_b'].shape),
                rep(lp['out_proj_w'].shape), rep(lp['out_proj_b'].shape),
                rep(lp['ln1_g'].shape), rep(lp['ln1_b'].shape),
                rep(lp['ff1_w'].shape), rep(lp['ff1_b'].shape),
                rep(lp['ff2_w'].shape), rep(lp['ff2_b'].shape),
                rep(lp['ln2_g'].shape), rep(lp['ln2_b'].shape),
            ],
            out_specs=pl.BlockSpec((S, E), lambda b: (b, 0)),
        ),
        compiler_params=pltpu.CompilerParams(
            dimension_semantics=("parallel",),
            vmem_limit_bytes=_VMEM_LIMIT),
    )(x_flat, mask,
      lp['in_proj_w'], lp['in_proj_b'], lp['out_proj_w'], lp['out_proj_b'],
      lp['ln1_g'], lp['ln1_b'], lp['ff1_w'], lp['ff1_b'],
      lp['ff2_w'], lp['ff2_b'], lp['ln2_g'], lp['ln2_b'])


# ---------------------------------------------------------------------------
# BaseBackbone forward
# ---------------------------------------------------------------------------
def generate_square_subsequent_mask(sz, sx, ss):
    total = sz + sx + ss
    h = int(sz / 2)
    mask = jnp.full((total, total), -jnp.inf, dtype=jnp.float32)
    mask = mask.at[:h, :h].set(0.0)
    mask = mask.at[h:sz, h:sz].set(0.0)
    mask = mask.at[h:sz, sz:sz + sx].set(0.0)
    mask = mask.at[h:sz, -1].set(0.0)
    mask = mask.at[sz:sz + sx, :sz + sx].set(0.0)
    mask = mask.at[sz + sx:, :].set(0.0)
    return mask


def forward(prep, z, x, seqs_input, nhead=8):
    B = x.shape[0]
    E = prep['word_emb'].shape[1]

    # z and x share every ResNet / conv_adjust kernel launch (batched along N).
    imgs = jnp.concatenate([z, x], axis=0)                           # (2B, 3, H, W)
    imgs = jnp.transpose(imgs, (0, 2, 3, 1)).astype(jnp.bfloat16)    # NHWC bf16
    feats = resnet50_features(imgs, prep['backbone'])
    adj = conv_bn_act(feats['layer4'], prep['conv_adjust'],
                      kh=1, kw=1, stride=1, pad=0, relu=False, out_dtype=jnp.float32)
    z_adj, x_adj = adj[:B], adj[B:]

    # NHWC already -> flatten(2).transpose(1,2) of the NCHW reference == reshape here
    z_flat = z_adj.reshape(B, -1, E)
    x_flat = x_adj.reshape(B, -1, E)
    len_z, len_x = z_flat.shape[1], x_flat.shape[1]

    seqs = seqs_input.astype(jnp.int32)
    tgt = prep['word_emb'][seqs]                                     # (B, L, E)
    query_seq_embed = jnp.concatenate([prep['prev_pos_emb'], prep['pos_emb']], axis=0)
    # TODO(synk): reference slices query_seq_embed[:, :L] (the batch dim), which is
    # shape-inconsistent; the intended "first L positional embeddings" is used here.
    tgt = tgt + query_seq_embed[:tgt.shape[1]][None, :, :]
    len_seq = tgt.shape[1]

    S = len_z + len_x + len_seq
    mask = generate_square_subsequent_mask(len_z, len_x, len_seq)
    # combine_tokens(..., mode='direct') == concat along the token dimension.
    # TODO(synk): reference cats (B, lz+lx, E) with (L, B, E) on dim 0 (shape-
    # inconsistent); the intended per-batch token sequence is used here.
    zxs = jnp.concatenate([z_flat, x_flat, tgt], axis=1)             # (B, S, E)

    Sp = _round_up(S, 8)
    if Sp != S:   # keep the per-batch block sublane-aligned; padded tokens are masked
        zxs = jnp.pad(zxs, ((0, 0), (0, Sp - S), (0, 0)))
        mask = jnp.pad(mask, ((0, Sp - S), (0, Sp - S)), constant_values=-jnp.inf)

    # pos_drop: dropout(p=0.1) is identity in eval mode.
    tok = zxs.reshape(B * Sp, E).astype(jnp.bfloat16)
    for lp in prep['layers']:
        tok = transformer_encoder_layer(tok, mask, lp, nhead=nhead)
    zxs_out = tok.reshape(B, Sp, E)[:, :S, :].astype(jnp.float32)
    zxs_sbe = zxs_out.transpose(1, 0, 2)                             # (S, B, E)

    z_0_feat = zxs_sbe[:len_z]
    z_1_feat = zxs_sbe[:len_z]
    x_feat = zxs_sbe[len_z:len_z + len_x]
    score_feat = zxs_sbe[-1]

    # Final logits: lane width == seq_len (10) would force masked stores in a
    # Pallas kernel, so this tiny projection + top-k stay in plain XLA.
    share_weight = prep['word_emb'].T                                # (E, V)
    out = jnp.einsum('sbe,ev->sbv', x_feat, share_weight) + prep['output_bias']
    temp = out.transpose(1, 0, 2)
    value = jnp.max(out, axis=-1, keepdims=True)                     # topk(k=1) values
    extra_seq = jnp.argmax(out, axis=-1)[..., None]                  # topk(k=1) indices
    # TODO(synk): the reference per-row topk loop builds 2-D tensors and then calls
    # permute(1,0,2) on them; the consistent 3-D topk result is used instead.
    output = {
        'seqs': extra_seq.transpose(1, 0, 2),
        'class': value.transpose(1, 0, 2),
        'feat': temp.transpose(1, 0, 2),
        'state': 'val/test',
        'x_feat': x_adj,                       # already NHWC == permute(0,2,3,1)
        'seq_feat': x_feat.transpose(1, 0, 2),
    }
    return output, z_0_feat, z_1_feat, x_feat, score_feat


# ---------------------------------------------------------------------------
# Deterministic synthetic parameter initialization + one-time kernel layout prep
# ---------------------------------------------------------------------------
class KeyGen:
    def __init__(self, seed):
        self._key = jax.random.PRNGKey(seed)

    def __call__(self):
        self._key, sub = jax.random.split(self._key)
        return sub


def _conv_init(kg, shape, gain=1.0):
    cout, _, kh, kw = shape
    std = math.sqrt(2.0 / (cout * kh * kw)) * gain    # kaiming_normal_, fan_out
    return jax.random.normal(kg(), shape, jnp.float32) * std


def _bn_init(c):
    return {'gamma': jnp.ones((c,), jnp.float32), 'beta': jnp.zeros((c,), jnp.float32),
            'mean': jnp.zeros((c,), jnp.float32), 'var': jnp.ones((c,), jnp.float32)}


def init_resnet50(kg):
    gain = 0.5   # damp synthetic (non-pretrained) weights for numerical sanity
    p = {'conv1_w': _conv_init(kg, (64, 3, 7, 7), gain), 'bn1': _bn_init(64)}
    in_ch = 64
    for li, (width, nblocks, _) in enumerate(RESNET50_CFG):
        blocks = []
        for b in range(nblocks):
            s = (2 if li > 0 else 1) if b == 0 else 1
            bp = {'conv1_w': _conv_init(kg, (width, in_ch, 1, 1), gain), 'bn1': _bn_init(width),
                  'conv2_w': _conv_init(kg, (width, width, 3, 3), gain), 'bn2': _bn_init(width),
                  'conv3_w': _conv_init(kg, (width * 4, width, 1, 1), gain), 'bn3': _bn_init(width * 4)}
            if s != 1 or in_ch != width * 4:
                bp['down_w'] = _conv_init(kg, (width * 4, in_ch, 1, 1), gain)
                bp['down_bn'] = _bn_init(width * 4)
            blocks.append(bp)
            in_ch = width * 4
        p[f'layer{li + 1}'] = blocks
    return p


def init_params(seed, embed_dim=128, seq_len=10, dim_ff=2048, num_layers=6):
    kg = KeyGen(seed)
    params = {'backbone': init_resnet50(kg)}
    # TODO(synk): reference reads self.backbone.fc.in_features AFTER replacing fc with
    # nn.Identity() (AttributeError); resnet50's fc.in_features == 2048 is used.
    in_feat = 2048
    params['conv_adjust_w'] = _conv_init(kg, (embed_dim, in_feat, 1, 1))
    params['conv_adjust_b'] = jnp.zeros((embed_dim,), jnp.float32)
    params['word_emb'] = jax.random.normal(kg(), (seq_len, embed_dim), jnp.float32)
    params['pos_emb'] = jax.random.normal(kg(), (seq_len, embed_dim), jnp.float32) * 0.02
    params['prev_pos_emb'] = jax.random.normal(kg(), (seq_len, embed_dim), jnp.float32) * 0.02
    # TODO(synk): reference declares output_bias with size embed_dim but adds it to a
    # vocab(=seq_len)-sized logit tensor; a zero bias of size seq_len is used here.
    params['output_bias'] = jnp.zeros((seq_len,), jnp.float32)
    layers = []
    for _ in range(num_layers):
        layers.append({
            'in_proj_w': jax.random.normal(kg(), (embed_dim, 3 * embed_dim), jnp.float32) * (embed_dim ** -0.5),
            'in_proj_b': jnp.zeros((3 * embed_dim,), jnp.float32),
            'out_proj_w': jax.random.normal(kg(), (embed_dim, embed_dim), jnp.float32) * (embed_dim ** -0.5),
            'out_proj_b': jnp.zeros((embed_dim,), jnp.float32),
            'ff1_w': jax.random.normal(kg(), (embed_dim, dim_ff), jnp.float32) * 0.02,
            'ff1_b': jnp.zeros((dim_ff,), jnp.float32),
            'ff2_w': jax.random.normal(kg(), (dim_ff, embed_dim), jnp.float32) * 0.02,
            'ff2_b': jnp.zeros((embed_dim,), jnp.float32),
            'ln1_g': jnp.ones((embed_dim,), jnp.float32), 'ln1_b': jnp.zeros((embed_dim,), jnp.float32),
            'ln2_g': jnp.ones((embed_dim,), jnp.float32), 'ln2_b': jnp.zeros((embed_dim,), jnp.float32),
        })
    params['encoder_layers'] = layers
    return params


def _fold_bn(bn, eps=1e-5):
    scale = bn['gamma'] / jnp.sqrt(bn['var'] + eps)
    shift = bn['beta'] - bn['mean'] * scale
    return scale.astype(jnp.float32), shift.astype(jnp.float32)


def _prep_conv(w_pt, bn=None, bias=None):
    """PyTorch (Cout, Cin, kh, kw) -> matmul layout (kh*kw*Cin, Cout) bf16 + folded BN."""
    cout, cin, kh, kw = w_pt.shape
    w2 = jnp.transpose(w_pt, (2, 3, 1, 0)).reshape(kh * kw * cin, cout).astype(jnp.bfloat16)
    if bn is not None:
        scale, shift = _fold_bn(bn)
    else:
        scale = jnp.ones((cout,), jnp.float32)
        shift = jnp.zeros((cout,), jnp.float32)
    if bias is not None:
        shift = shift + bias.astype(jnp.float32) * scale
    out = {'w': w2, 'scale': scale, 'shift': shift}
    if kh == 3 and kw == 3:
        out['w3'] = w2.reshape(kh * kw, cin, cout)   # per-tap layout for the folded kernel
    return out


def prepare_params(params):
    """One-time weight relayout / bf16 cast / BN folding (no per-call padding)."""
    bb = params['backbone']
    prep_bb = {'stem': _prep_conv(bb['conv1_w'], bb['bn1'])}
    for li in range(4):
        blocks = []
        for bp in bb[f'layer{li + 1}']:
            pb = {'c1': _prep_conv(bp['conv1_w'], bp['bn1']),
                  'c2': _prep_conv(bp['conv2_w'], bp['bn2']),
                  'c3': _prep_conv(bp['conv3_w'], bp['bn3'])}
            if 'down_w' in bp:
                pb['down'] = _prep_conv(bp['down_w'], bp['down_bn'])
            blocks.append(pb)
        prep_bb[f'layer{li + 1}'] = blocks
    prep = {'backbone': prep_bb,
            'conv_adjust': _prep_conv(params['conv_adjust_w'], None, params['conv_adjust_b']),
            'word_emb': params['word_emb'],
            'pos_emb': params['pos_emb'],
            'prev_pos_emb': params['prev_pos_emb'],
            'output_bias': params['output_bias'],
            'layers': []}
    for lp in params['encoder_layers']:
        prep['layers'].append({
            'in_proj_w': lp['in_proj_w'].astype(jnp.bfloat16),
            'in_proj_b': lp['in_proj_b'].reshape(1, -1).astype(jnp.float32),
            'out_proj_w': lp['out_proj_w'].astype(jnp.bfloat16),
            'out_proj_b': lp['out_proj_b'].reshape(1, -1).astype(jnp.float32),
            'ff1_w': lp['ff1_w'].astype(jnp.bfloat16),
            'ff1_b': lp['ff1_b'].reshape(1, -1).astype(jnp.float32),
            'ff2_w': lp['ff2_w'].astype(jnp.bfloat16),
            'ff2_b': lp['ff2_b'].reshape(1, -1).astype(jnp.float32),
            'ln1_g': lp['ln1_g'].reshape(1, -1).astype(jnp.float32),
            'ln1_b': lp['ln1_b'].reshape(1, -1).astype(jnp.float32),
            'ln2_g': lp['ln2_g'].reshape(1, -1).astype(jnp.float32),
            'ln2_b': lp['ln2_b'].reshape(1, -1).astype(jnp.float32),
        })
    return prep


if __name__ == "__main__":
    EMBED_DIM = 128    # module default is 256; 128 stays small, lane-dense and /8 heads
    SEQ_LEN = 10       # module default

    params = init_params(seed=0, embed_dim=EMBED_DIM, seq_len=SEQ_LEN)
    prep = prepare_params(params)

    key = jax.random.PRNGKey(0)
    kz, kx, ks = jax.random.split(key, 3)
    z = jax.random.normal(kz, (2, 3, 64, 64), jnp.float32)      # template image (NCHW)
    x = jax.random.normal(kx, (2, 3, 64, 64), jnp.float32)      # search image (NCHW)
    seqs_input = jax.random.randint(ks, (2, 8), 0, SEQ_LEN)     # token ids < seq_len

    output, z0, z1, x_feat, score_feat = forward(prep, z, x, seqs_input)
    jax.block_until_ready((output['seqs'], output['class'], output['feat'],
                           output['x_feat'], output['seq_feat'],
                           z0, z1, x_feat, score_feat))
    print("KERNEL_OK")
</pallas_src>

<mosaic_0001>
module attributes {stable_mosaic.version = 11 : i64} {
  func.func @_fused_mm_kernel(%arg0: i32, %arg1: i32, %arg2: i32, %arg3: memref<512x147xbf16, #tpu.memory_space<vmem>>, %arg4: memref<147x64xbf16, #tpu.memory_space<vmem>>, %arg5: memref<1x64xf32, #tpu.memory_space<vmem>>, %arg6: memref<1x64xf32, #tpu.memory_space<vmem>>, %arg7: memref<512x64xbf16, #tpu.memory_space<vmem>>, %arg8: memref<512x64xf32, #tpu.memory_space<vmem>>) attributes {dimension_semantics = [#tpu.dimension_semantics<parallel>, #tpu.dimension_semantics<parallel>, #tpu.dimension_semantics<arbitrary>], iteration_bounds = array<i64: 8, 1, 1>, scalar_prefetch = 0 : i64, scratch_operands = 1 : i64, tpu.core_type = #tpu.core_type<tc>, window_params = [{transform_indices = @transform_0, window_bounds = array<i64: 512, 147>}, {transform_indices = @transform_1, window_bounds = array<i64: 147, 64>}, {transform_indices = @transform_2, window_bounds = array<i64: 1, 64>}, {transform_indices = @transform_3, window_bounds = array<i64: 1, 64>}, {transform_indices = @transform_4, window_bounds = array<i64: 512, 64>}]} {
    %c0_i32 = arith.constant 0 : i32
    %0 = arith.cmpi eq, %arg2, %c0_i32 : i32
    %1 = arith.extui %0 : i1 to i32
    %c0_i32_0 = arith.constant 0 : i32
    %2 = arith.cmpi ne, %1, %c0_i32_0 : i32
    scf.if %2 {
      %cst_10 = arith.constant 0.000000e+00 : f32
      %12 = vector.broadcast %cst_10 : f32 to vector<512x64xf32>
      %c0_11 = arith.constant 0 : index
      %c0_12 = arith.constant 0 : index
      %13 = vector.load %arg8[%c0_11, %c0_12] : memref<512x64xf32, #tpu.memory_space<vmem>>, vector<512x64xf32>
      tpu.vector_store %arg8[%c0_11, %c0_12], %12 {strides = array<i32>} : memref<512x64xf32, #tpu.memory_space<vmem>>, vector<512x64xf32>,
    } else {
    }
    %c0 = arith.constant 0 : index
    %c0_1 = arith.constant 0 : index
    %3 = vector.load %arg8[%c0, %c0_1] : memref<512x64xf32, #tpu.memory_space<vmem>>, vector<512x64xf32>
    %c0_2 = arith.constant 0 : index
    %c0_3 = arith.constant 0 : index
    %4 = vector.load %arg3[%c0_2, %c0_3] : memref<512x147xbf16, #tpu.memory_space<vmem>>, vector<512x147xbf16>
    %c0_4 = arith.constant 0 : index
    %c0_5 = arith.constant 0 : index
    %5 = vector.load %arg4[%c0_4, %c0_5] : memref<147x64xbf16, #tpu.memory_space<vmem>>, vector<147x64xbf16>
    %cst = arith.constant dense<0.000000e+00> : vector<512x64xf32>
    %6 = tpu.matmul %4, %5, %cst {dimension_numbers = #tpu.dot_dimension_numbers<[1], [0], [0], [1], [0, 0, 1, 1], [], []>} : vector<512x147xbf16>, vector<147x64xbf16>, vector<512x64xf32> -> vector<512x64xf32>
    %7 = arith.addf %3, %6 : vector<512x64xf32>
    %c0_6 = arith.constant 0 : index
    %c0_7 = arith.constant 0 : index
    %8 = vector.load %arg8[%c0_6, %c0_7] : memref<512x64xf32, #tpu.memory_space<vmem>>, vector<512x64xf32>
    tpu.vector_store %arg8[%c0_6, %c0_7], %7 {strides = array<i32>} : memref<512x64xf32, #tpu.memory_space<vmem>>, vector<512x64xf32>,
    %c0_i32_8 = arith.constant 0 : i32
    %9 = arith.cmpi eq, %arg2, %c0_i32_8 : i32
    %10 = arith.extui %9 : i1 to i32
    %c0_i32_9 = arith.constant 0 : i32
    %11 = arith.cmpi ne, %10, %c0_i32_9 : i32
    scf.if %11 {
      %c0_10 = arith.constant 0 : index
      %c0_11 = arith.constant 0 : index
      %12 = vector.load %arg8[%c0_10, %c0_11] : memref<512x64xf32, #tpu.memory_space<vmem>>, vector<512x64xf32>
      %c0_12 = arith.constant 0 : index
      %c0_13 = arith.constant 0 : index
      %13 = vector.load %arg5[%c0_12, %c0_13] : memref<1x64xf32, #tpu.memory_space<vmem>>, vector<1x64xf32>
      %14 = vector.broadcast %13 : vector<1x64xf32> to vector<512x64xf32>
      %15 = arith.mulf %12, %14 : vector<512x64xf32>
      %c0_14 = arith.constant 0 : index
      %c0_15 = arith.constant 0 : index
      %16 = vector.load %arg6[%c0_14, %c0_15] : memref<1x64xf32, #tpu.memory_space<vmem>>, vector<1x64xf32>
      %17 = vector.broadcast %16 : vector<1x64xf32> to vector<512x64xf32>
      %18 = arith.addf %15, %17 : vector<512x64xf32>
      %cst_16 = arith.constant 0.000000e+00 : f32
      %19 = vector.broadcast %cst_16 : f32 to vector<512x64xf32>
      %20 = arith.maximumf %18, %19 : vector<512x64xf32>
      %21 = arith.truncf %20 : vector<512x64xf32> to vector<512x64xbf16>
      %c0_17 = arith.constant 0 : index
      %c0_18 = arith.constant 0 : index
      %22 = vector.load %arg7[%c0_17, %c0_18] : memref<512x64xbf16, #tpu.memory_space<vmem>>, vector<512x64xbf16>
      tpu.vector_store %arg7[%c0_17, %c0_18], %21 {strides = array<i32>} : memref<512x64xbf16, #tpu.memory_space<vmem>>, vector<512x64xbf16>,
    } else {
    }
    return
  }
  func.func @transform_0(%arg0: i32, %arg1: i32, %arg2: i32) -> (i32, i32) {
    %c0_i32 = arith.constant 0 : i32
    return %arg0, %arg2 : i32, i32
  }
  func.func @transform_1(%arg0: i32, %arg1: i32, %arg2: i32) -> (i32, i32) {
    %c0_i32 = arith.constant 0 : i32
    return %arg2, %arg1 : i32, i32
  }
  func.func @transform_2(%arg0: i32, %arg1: i32, %arg2: i32) -> (i32, i32) {
    %c0_i32 = arith.constant 0 : i32
    %c0_i32_0 = arith.constant 0 : i32
    return %c0_i32, %arg1 : i32, i32
  }
  func.func @transform_3(%arg0: i32, %arg1: i32, %arg2: i32) -> (i32, i32) {
    %c0_i32 = arith.constant 0 : i32
    %c0_i32_0 = arith.constant 0 : i32
    return %c0_i32, %arg1 : i32, i32
  }
  func.func @transform_4(%arg0: i32, %arg1: i32, %arg2: i32) -> (i32, i32) {
    %c0_i32 = arith.constant 0 : i32
    return %arg0, %arg1 : i32, i32
  }
}

</mosaic_0001>

<llo_original>
// kernel: fused_matmul.1
$region0: #{fused_matmul.1}
  #allocation0 [shape = 'u32[]', space=smem, size = 0x4, offset = 0x4, fixed_abs, tag = 'smem constant byte address 0x4 - core index']
  #allocation1 [shape = 'u32[144,128]{1,0:T(1,128)}', space=vmem, size = 0x12000, scoped, tag = 'internal scratch']
  #allocation2 [shape = 'f32[512,64]{1,0:T(8,128)}', space=vmem, size = 0x40000, scoped, tag = 'scratch operand']
  %s0 = inlined_call_operand.vmem [shape: bf16[4096,147], index: 0, kind: input, shape index: {}]
  %s1 = inlined_call_operand.vmem [shape: bf16[147,64], index: 1, kind: input, shape index: {}]
  %s2 = inlined_call_operand.vmem [shape: f32[1,64], index: 2, kind: input, shape index: {}]
  %s3 = inlined_call_operand.vmem [shape: f32[1,64], index: 3, kind: input, shape index: {}]
  %s4 = inlined_call_operand.vmem [shape: bf16[4096,64], index: 4, kind: output, shape index: {}]
  %s5 = sld [smem:[#allocation0]]
  $region57: #{fused_matmul.1} parent=0
    _
  %s7 = ssub.s32 1, %s5
  %s8 = scalar_select 0, %s7, %s5
  loop: start=0, step=1, limit=10
  $region2: #{fused_matmul.1} parent=0 // loop_pre_header
    _
  $region3: #{fused_matmul.1} parent=0 // loop_header
    %s10 = sphi 0, %s14
    %p11 = scmp.ge.s32.totalorder %s10, 10
    %s17 = sphi 0, %s36
    %s18 = sphi 0, %s32
    %s19 = sphi 0, %s28
    %s20 = sphi 0, %s17
    %s21 = sphi 0, %s18
    %s22 = sphi 0, %s19
    %s23 = sphi 0, %s20
    %s24 = sphi 0, %s21
    %s25 = sphi 0, %s22
    %s41 = sphi 0, %s43
    %s44 = sphi 0, %s41
    %s45 = sphi 0, %s44
    %s61 = sphi 0, %s45
    %s69 = sphi 0, %s71
    %s72 = sphi 0, %s69
    %s73 = sphi 0, %s72
    %s89 = sphi 0, %s73
    %s95 = sphi 0, %s97
    %s98 = sphi 0, %s95
    %s99 = sphi 0, %s98
    %s115 = sphi 0, %s99
    %s121 = sphi 0, %s123
    %s124 = sphi 0, %s121
    %s125 = sphi 0, %s124
    %s141 = sphi 0, %s125
    %s149 = sphi 0, %s151
    %s152 = sphi 0, %s149
    %s153 = sphi 0, %s152
    %s169 = sphi 0, %s153
  $region4: #{fused_matmul.1} parent=0 // loop_header_branch
    %13 = sbr.rel (%p11) target = $region8
  $region5: #{fused_matmul.1} parent=0 // loop_body
    %s15 = ssub.s32 %s10, 1
    %s16 = ssub.s32 %s10, 2
    %s26 = sadd.s32 1, %s19
    %p27 = scmp.ge.s32.totalorder %s26, 1
    %s28 = scalar_select %p27, 0, %s26
    %s29 = sadd.s32 1, %s18
    %s30 = scalar_select %p27, %s29, %s18
    %p31 = scmp.ge.s32.totalorder %s30, 1
    %s32 = scalar_select %p31, 0, %s30
    %s33 = sadd.s32 1, %s17
    %s34 = scalar_select %p31, %s33, %s17
    %p35 = scmp.ge.s32.totalorder %s34, 8
    %s36 = scalar_select %p35, 0, %s34
    %s37 = ssub.s32 %s17, %s36
    %s38 = ssub.s32 %s19, %s28
    %s39 = sor.u32 %s37, %s38
    %p40 = scmp.eq.s32.totalorder %s39, 0
    %s42 = sadd.s32 %s41, 1
    %s43 = scalar_select %p40, %s41, %s42
    %p46 = pneg %p40
    %p47 = scmp.eq.s32.totalorder %s10, 7
    %p48 = por %p46, %p47
    %p49 = scmp.ne.s32.totalorder %s41, %s44
    %p50 = scmp.eq.s32.totalorder %s10, 0
    %p51 = por %p49, %p50
    %p52 = scmp.ne.s32.totalorder %s41, %s44
    %p53 = scmp.eq.s32.totalorder %s15, 7
    %p54 = por %p52, %p53
    %p55 = scmp.ne.s32.totalorder %s44, %s45
    %p56 = scmp.eq.s32.totalorder %s15, 0
    %p57 = por %p55, %p56
    %p58 = scmp.ne.s32.totalorder %s44, %s45
    %p59 = scmp.eq.s32.totalorder %s16, 7
    %p60 = por %p58, %p59
    %p62 = scmp.ne.s32.totalorder %s45, %s61
    %p63 = scmp.eq.s32.totalorder %s16, 0
    %p64 = por %p62, %p63
    %s65 = ssub.s32 %s19, %s28
    %s66 = ssub.s32 %s18, %s32
    %s67 = sor.u32 %s65, %s66
    %p68 = scmp.eq.s32.totalorder %s67, 0
    %s70 = sadd.s32 %s69, 1
    %s71 = scalar_select %p68, %s69, %s70
    %p74 = pneg %p68
    %p75 = scmp.eq.s32.totalorder %s10, 7
    %p76 = por %p74, %p75
    %p77 = scmp.ne.s32.totalorder %s69, %s72
    %p78 = scmp.eq.s32.totalorder %s10, 0
    %p79 = por %p77, %p78
    %p80 = scmp.ne.s32.totalorder %s69, %s72
    %p81 = scmp.eq.s32.totalorder %s15, 7
    %p82 = por %p80, %p81
    %p83 = scmp.ne.s32.totalorder %s72, %s73
    %p84 = scmp.eq.s32.totalorder %s15, 0
    %p85 = por %p83, %p84
    %p86 = scmp.ne.s32.totalorder %s72, %s73
    %p87 = scmp.eq.s32.totalorder %s16, 7
    %p88 = por %p86, %p87
    %p90 = scmp.ne.s32.totalorder %s73, %s89
    %p91 = scmp.eq.s32.totalorder %s16, 0
    %p92 = por %p90, %p91
    %s93 = ssub.s32 %s18, %s32
    %p94 = scmp.eq.s32.totalorder %s93, 0
    %s96 = sadd.s32 %s95, 1
    %s97 = scalar_select %p94, %s95, %s96
    %p100 = pneg %p94
    %p101 = scmp.eq.s32.totalorder %s10, 7
    %p102 = por %p100, %p101
    %p103 = scmp.ne.s32.totalorder %s95, %s98
    %p104 = scmp.eq.s32.totalorder %s10, 0
    %p105 = por %p103, %p104
    %p106 = scmp.ne.s32.totalorder %s95, %s98
    %p107 = scmp.eq.s32.totalorder %s15, 7
    %p108 = por %p106, %p107
    %p109 = scmp.ne.s32.totalorder %s98, %s99
    %p110 = scmp.eq.s32.totalorder %s15, 0
    %p111 = por %p109, %p110
    %p112 = scmp.ne.s32.totalorder %s98, %s99
    %p113 = scmp.eq.s32.totalorder %s16, 7
    %p114 = por %p112, %p113
    %p116 = scmp.ne.s32.totalorder %s99, %s115
    %p117 = scmp.eq.s32.totalorder %s16, 0
    %p118 = por %p116, %p117
    %s119 = ssub.s32 %s18, %s32
    %p120 = scmp.eq.s32.totalorder %s119, 0
    %s122 = sadd.s32 %s121, 1
    %s123 = scalar_select %p120, %s121, %s122
    %p126 = pneg %p120
    %p127 = scmp.eq.s32.totalorder %s10, 7
    %p128 = por %p126, %p127
    %p129 = scmp.ne.s32.totalorder %s121, %s124
    %p130 = scmp.eq.s32.totalorder %s10, 0
    %p131 = por %p129, %p130
    %p132 = scmp.ne.s32.totalorder %s121, %s124
    %p133 = scmp.eq.s32.totalorder %s15, 7
    %p134 = por %p132, %p133
    %p135 = scmp.ne.s32.totalorder %s124, %s125
    %p136 = scmp.eq.s32.totalorder %s15, 0
    %p137 = por %p135, %p136
    %p138 = scmp.ne.s32.totalorder %s124, %s125
    %p139 = scmp.eq.s32.totalorder %s16, 7
    %p140 = por %p138, %p139
    %p142 = scmp.ne.s32.totalorder %s125, %s141
    %p143 = scmp.eq.s32.totalorder %s16, 0
    %p144 = por %p142, %p143
    %s145 = ssub.s32 %s17, %s36
    %s146 = ssub.s32 %s18, %s32
    %s147 = sor.u32 %s145, %s146
    %p148 = scmp.eq.s32.totalorder %s147, 0
    %s150 = sadd.s32 %s149, 1
    %s151 = scalar_select %p148, %s149, %s150
    %p154 = pneg %p148
    %p155 = scmp.eq.s32.totalorder %s10, 7
    %p156 = por %p154, %p155
    %p157 = scmp.ne.s32.totalorder %s149, %s152
    %p158 = scmp.eq.s32.totalorder %s10, 0
    %p159 = por %p157, %p158
    %p160 = scmp.ne.s32.totalorder %s149, %s152
    %p161 = scmp.eq.s32.totalorder %s15, 7
    %p162 = por %p160, %p161
    %p163 = scmp.ne.s32.totalorder %s152, %s153
    %p164 = scmp.eq.s32.totalorder %s15, 0
    %p165 = por %p163, %p164
    %p166 = scmp.ne.s32.totalorder %s152, %s153
    %p167 = scmp.eq.s32.totalorder %s16, 7
    %p168 = por %p166, %p167
    %p170 = scmp.ne.s32.totalorder %s153, %s169
    %p171 = scmp.eq.s32.totalorder %s16, 0
    %p172 = por %p170, %p171
    %p173 = scmp.le.s32.totalorder 1, %s10
    %p174 = scmp.lt.s32.totalorder %s10, 9
    %p175 = pnand %p173, %p174
    %p176 = pneg %p175
    // Predicated region
    $region9: #{fused_matmul.1} parent=5 // pred_check
      _
    $region10: #{fused_matmul.1} parent=5 // pred_check_branch
      %178 = sbr.rel (%p175) target = $region12
    $region11: #{fused_matmul.1} parent=5 // pred_region
      %s179 = ssub.s32 %s10, 1
      // Predicated region
      $region13: #{fused_matmul.1} parent=11 // pred_check
        %p180 = pneg %p85
      $region14: #{fused_matmul.1} parent=11 // pred_check_branch
        %182 = sbr.rel (%p180) target = $region16
      $region15: #{fused_matmul.1} parent=11 // pred_region
        %s183 = smul.u32 19, %s22
        %p184 = scmp.lt.s32.totalorder %s183, 18
        %s185 = scalar_select %p184, %s183, 18
        %p186 = scmp.lt.s32.totalorder %s21, 0
        %s187 = scalar_select %p186, %s21, 0
        %s188 = sadd.s32 %s187, %s185
        %s189 = smul.addr %s188, 4
        %s190 = scalar_lea.vmem %s1, %s189
        %s191 = smul.u32 19, %s22
      $region16: #{fused_matmul.1} parent=11 // pred_fallthru
        _
      // Predicated region
      $region17: #{fused_matmul.1} parent=11 // pred_check
        %p192 = pneg %p111
      $region18: #{fused_matmul.1} parent=11 // pred_check_branch
        %194 = sbr.rel (%p192) target = $region20
      $region19: #{fused_matmul.1} parent=11 // pred_region
        %p195 = scmp.lt.s32.totalorder %s21, 0
        %s196 = scalar_select %p195, %s21, 0
        %s197 = scalar_lea.vmem %s2, %s196
      $region20: #{fused_matmul.1} parent=11 // pred_fallthru
        _
      // Predicated region
      $region21: #{fused_matmul.1} parent=11 // pred_check
        %p198 = pneg %p137
      $region22: #{fused_matmul.1} parent=11 // pred_check_branch
        %200 = sbr.rel (%p198) target = $region24
      $region23: #{fused_matmul.1} parent=11 // pred_region
        %p201 = scmp.lt.s32.totalorder %s21, 0
        %s202 = scalar_select %p201, %s21, 0
        %s203 = scalar_lea.vmem %s3, %s202
      $region24: #{fused_matmul.1} parent=11 // pred_fallthru
        _
    $region12: #{fused_matmul.1} parent=5 // pred_fallthru
      _
    %p204 = scmp.lt.s32.totalorder %s10, 8
    // Predicated region
    $region25: #{fused_matmul.1} parent=5 // pred_check
      %p205 = pneg %p204
    $region26: #{fused_matmul.1} parent=5 // pred_check_branch
      %207 = sbr.rel (%p205) target = $region28
    $region27: #{fused_matmul.1} parent=5 // pred_region
      // Predicated region
      $region29: #{fused_matmul.1} parent=27 // pred_check
        %p208 = pneg %p51
      $region30: #{fused_matmul.1} parent=27 // pred_check_branch
        %210 = sbr.rel (%p208) target = $region32
      $region31: #{fused_matmul.1} parent=27 // pred_region
        %s211 = smul.u32 64, %s17
        %s212 = smul.u32 2, %s19
        %p213 = scmp.lt.s32.totalorder %s211, 511
        %s214 = scalar_select %p213, %s211, 511
        %p215 = scmp.lt.s32.totalorder %s212, 1
        %s216 = scalar_select %p215, %s212, 1
        %s217 = smul.addr %s214, 2
        %s218 = sadd.s32 %s216, %s217
        %s219 = smul.addr %s218, 4
        %s220 = scalar_lea.vmem %s0, %s219
        %s221 = smul.u32 64, %s17
        %s222 = smul.u32 2, %s19
      $region32: #{fused_matmul.1} parent=27 // pred_fallthru
        _
    $region28: #{fused_matmul.1} parent=5 // pred_fallthru
      _
    %p223 = scmp.le.s32.totalorder 1, %s10
    %p224 = scmp.lt.s32.totalorder %s10, 9
    %p225 = pnand %p223, %p224
    %p226 = pneg %p225
    // Predicated region
    $region33: #{fused_matmul.1} parent=5 // pred_check
      _
    $region34: #{fused_matmul.1} parent=5 // pred_check_branch
      %228 = sbr.rel (%p225) target = $region36
    $region35: #{fused_matmul.1} parent=5 // pred_region
      %s229 = ssub.s32 %s10, 1
      %s230 = smul.u32 64, %s20
      %s231 = smul.u32 2, %s22
      %p232 = scmp.lt.s32.totalorder %s230, 511
      %s233 = scalar_select %p232, %s230, 511
      %p234 = scmp.lt.s32.totalorder %s231, 1
      %s235 = scalar_select %p234, %s231, 1
      %s236 = smul.addr %s233, 2
      %s237 = sadd.s32 %s235, %s236
      %s238 = smul.addr %s237, 4
      %s239 = scalar_lea.vmem %s0, %s238
      %p240 = pneg %p57
      %p241 = pneg %p54
      %s242 = smul.u32 19, %s22
      %p243 = scmp.lt.s32.totalorder %s242, 18
      %s244 = scalar_select %p243, %s242, 18
      %p245 = scmp.lt.s32.totalorder %s21, 0
      %s246 = scalar_select %p245, %s21, 0
      %s247 = sadd.s32 %s246, %s244
      %s248 = smul.addr %s247, 4
      %s249 = scalar_lea.vmem %s1, %s248
      %p250 = pneg %p85
      %p251 = pneg %p82
      %p252 = scmp.lt.s32.totalorder %s21, 0
      %s253 = scalar_select %p252, %s21, 0
      %s254 = scalar_lea.vmem %s2, %s253
      %p255 = pneg %p111
      %p256 = pneg %p108
      %p257 = scmp.lt.s32.totalorder %s21, 0
      %s258 = scalar_select %p257, %s21, 0
      %s259 = scalar_lea.vmem %s3, %s258
      %p260 = pneg %p137
      %p261 = pneg %p134
      %p262 = pneg %p165
      %p263 = pneg %p162
      %s264 = smul.u32 64, %s20
      %p265 = scmp.lt.s32.totalorder %s264, 511
      %s266 = scalar_select %p265, %s264, 511
      %p267 = scmp.lt.s32.totalorder %s21, 0
      %s268 = scalar_select %p267, %s21, 0
      %s269 = sadd.s32 %s268, %s266
      %s270 = smul.addr %s269, 4
      %s271 = scalar_lea.vmem %s4, %s270
      %s272 = smul.u32 64, %s20
      %s273 = smul.u32 2, %s22
      %p274 = scmp.lt.s32.totalorder %s272, 511
      %s275 = scalar_select %p274, %s272, 511
      %p276 = scmp.lt.s32.totalorder %s273, 1
      %s277 = scalar_select %p276, %s273, 1
      %s278 = smul.addr %s275, 2
      %s279 = sadd.s32 %s277, %s278
      %s280 = smul.addr %s279, 4
      %s281 = scalar_lea.vmem %s0, %s280
      %s282 = smul.u32 64, %s20
      %s283 = smul.u32 2, %s22
      %s284 = smul.u32 19, %s22
      %p285 = scmp.lt.s32.totalorder %s284, 18
      %s286 = scalar_select %p285, %s284, 18
      %p287 = scmp.lt.s32.totalorder %s21, 0
      %s288 = scalar_select %p287, %s21, 0
      %s289 = sadd.s32 %s288, %s286
      %s290 = smul.addr %s289, 4
      %s291 = scalar_lea.vmem %s1, %s290
      %s292 = smul.u32 19, %s22
      %p293 = scmp.lt.s32.totalorder %s21, 0
      %s294 = scalar_select %p293, %s21, 0
      %s295 = scalar_lea.vmem %s2, %s294
      %p296 = scmp.lt.s32.totalorder %s21, 0
      %s297 = scalar_select %p296, %s21, 0
      %s298 = scalar_lea.vmem %s3, %s297
      %s299 = smul.u32 64, %s20
      %p300 = scmp.lt.s32.totalorder %s299, 511
      %s301 = scalar_select %p300, %s299, 511
      %p302 = scmp.lt.s32.totalorder %s21, 0
      %s303 = scalar_select %p302, %s21, 0
      %s304 = sadd.s32 %s303, %s301
      %s305 = smul.addr %s304, 4
      %s306 = scalar_lea.vmem %s4, %s305
      %s307 = smul.u32 64, %s20
      %p309 = scmp.eq.s32.totalorder %s22, 0
      // Predicated region
      $region37: #{fused_matmul.1} parent=35 // pred_check
        %p310 = pneg %p309
      $region38: #{fused_matmul.1} parent=35 // pred_check_branch
        %312 = sbr.rel (%p310) target = $region40
      $region39: #{fused_matmul.1} parent=35 // pred_region
        %vm313 = vcmask 523264
        %314 = vst.msk [vmem:[#allocation2] sm:$0xff] %vm313, 0.0
        %315 = vst.msk [vmem:[#allocation2 + $0x8] sm:$0xff] %vm313, 0.0
        %316 = vst.msk [vmem:[#allocation2 + $0x10] sm:$0xff] %vm313, 0.0
        %317 = vst.msk [vmem:[#allocation2 + $0x18] sm:$0xff] %vm313, 0.0
        %318 = vst.msk [vmem:[#allocation2 + $0x20] sm:$0xff] %vm313, 0.0
        %319 = vst.msk [vmem:[#allocation2 + $0x28] sm:$0xff] %vm313, 0.0
        %320 = vst.msk [vmem:[#allocation2 + $0x30] sm:$0xff] %vm313, 0.0
        %321 = vst.msk [vmem:[#allocation2 + $0x38] sm:$0xff] %vm313, 0.0
        %322 = vst.msk [vmem:[#allocation2 + $0x40] sm:$0xff] %vm313, 0.0
        %323 = vst.msk [vmem:[#allocation2 + $0x48] sm:$0xff] %vm313, 0.0
        %324 = vst.msk [vmem:[#allocation2 + $0x50] sm:$0xff] %vm313, 0.0
        %325 = vst.msk [vmem:[#allocation2 + $0x58] sm:$0xff] %vm313, 0.0
        %326 = vst.msk [vmem:[#allocation2 + $0x60] sm:$0xff] %vm313, 0.0
        %327 = vst.msk [vmem:[#allocation2 + $0x68] sm:$0xff] %vm313, 0.0
        %328 = vst.msk [vmem:[#allocation2 + $0x70] sm:$0xff] %vm313, 0.0
        %329 = vst.msk [vmem:[#allocation2 + $0x78] sm:$0xff] %vm313, 0.0
        %330 = vst.msk [vmem:[#allocation2 + $0x80] sm:$0xff] %vm313, 0.0
        %331 = vst.msk [vmem:[#allocation2 + $0x88] sm:$0xff] %vm313, 0.0
        %332 = vst.msk [vmem:[#allocation2 + $0x90] sm:$0xff] %vm313, 0.0
        %333 = vst.msk [vmem:[#allocation2 + $0x98] sm:$0xff] %vm313, 0.0
        %334 = vst.msk [vmem:[#allocation2 + $0xa0] sm:$0xff] %vm313, 0.0
        %335 = vst.msk [vmem:[#allocation2 + $0xa8] sm:$0xff] %vm313, 0.0
        %336 = vst.msk [vmem:[#allocation2 + $0xb0] sm:$0xff] %vm313, 0.0
        %337 = vst.msk [vmem:[#allocation2 + $0xb8] sm:$0xff] %vm313, 0.0
        %338 = vst.msk [vmem:[#allocation2 + $0xc0] sm:$0xff] %vm313, 0.0
        %339 = vst.msk [vmem:[#allocation2 + $0xc8] sm:$0xff] %vm313, 0.0
        %340 = vst.msk [vmem:[#allocation2 + $0xd0] sm:$0xff] %vm313, 0.0
        %341 = vst.msk [vmem:[#allocation2 + $0xd8] sm:$0xff] %vm313, 0.0
        %342 = vst.msk [vmem:[#allocation2 + $0xe0] sm:$0xff] %vm313, 0.0
        %343 = vst.msk [vmem:[#allocation2 + $0xe8] sm:$0xff] %vm313, 0.0
        %344 = vst.msk [vmem:[#allocation2 + $0xf0] sm:$0xff] %vm313, 0.0
        %345 = vst.msk [vmem:[#allocation2 + $0xf8] sm:$0xff] %vm313, 0.0
        %346 = vst.msk [vmem:[#allocation2 + $0x100] sm:$0xff] %vm313, 0.0
        %347 = vst.msk [vmem:[#allocation2 + $0x108] sm:$0xff] %vm313, 0.0
        %348 = vst.msk [vmem:[#allocation2 + $0x110] sm:$0xff] %vm313, 0.0
        %349 = vst.msk [vmem:[#allocation2 + $0x118] sm:$0xff] %vm313, 0.0
        %350 = vst.msk [vmem:[#allocation2 + $0x120] sm:$0xff] %vm313, 0.0
        %351 = vst.msk [vmem:[#allocation2 + $0x128] sm:$0xff] %vm313, 0.0
        %352 = vst.msk [vmem:[#allocation2 + $0x130] sm:$0xff] %vm313, 0.0
        %353 = vst.msk [vmem:[#allocation2 + $0x138] sm:$0xff] %vm313, 0.0
        %354 = vst.msk [vmem:[#allocation2 + $0x140] sm:$0xff] %vm313, 0.0
        %355 = vst.msk [vmem:[#allocation2 + $0x148] sm:$0xff] %vm313, 0.0
        %356 = vst.msk [vmem:[#allocation2 + $0x150] sm:$0xff] %vm313, 0.0
        %357 = vst.msk [vmem:[#allocation2 + $0x158] sm:$0xff] %vm313, 0.0
        %358 = vst.msk [vmem:[#allocation2 + $0x160] sm:$0xff] %vm313, 0.0
        %359 = vst.msk [vmem:[#allocation2 + $0x168] sm:$0xff] %vm313, 0.0
        %360 = vst.msk [vmem:[#allocation2 + $0x170] sm:$0xff] %vm313, 0.0
        %361 = vst.msk [vmem:[#allocation2 + $0x178] sm:$0xff] %vm313, 0.0
        %362 = vst.msk [vmem:[#allocation2 + $0x180] sm:$0xff] %vm313, 0.0
        %363 = vst.msk [vmem:[#allocation2 + $0x188] sm:$0xff] %vm313, 0.0
        %364 = vst.msk [vmem:[#allocation2 + $0x190] sm:$0xff] %vm313, 0.0
        %365 = vst.msk [vmem:[#allocation2 + $0x198] sm:$0xff] %vm313, 0.0
        %366 = vst.msk [vmem:[#allocation2 + $0x1a0] sm:$0xff] %vm313, 0.0
        %367 = vst.msk [vmem:[#allocation2 + $0x1a8] sm:$0xff] %vm313, 0.0
        %368 = vst.msk [vmem:[#allocation2 + $0x1b0] sm:$0xff] %vm313, 0.0
        %369 = vst.msk [vmem:[#allocation2 + $0x1b8] sm:$0xff] %vm313, 0.0
        %370 = vst.msk [vmem:[#allocation2 + $0x1c0] sm:$0xff] %vm313, 0.0
        %371 = vst.msk [vmem:[#allocation2 + $0x1c8] sm:$0xff] %vm313, 0.0
        %372 = vst.msk [vmem:[#allocation2 + $0x1d0] sm:$0xff] %vm313, 0.0
        %373 = vst.msk [vmem:[#allocation2 + $0x1d8] sm:$0xff] %vm313, 0.0
        %374 = vst.msk [vmem:[#allocation2 + $0x1e0] sm:$0xff] %vm313, 0.0
        %375 = vst.msk [vmem:[#allocation2 + $0x1e8] sm:$0xff] %vm313, 0.0
        %376 = vst.msk [vmem:[#allocation2 + $0x1f0] sm:$0xff] %vm313, 0.0
        %377 = vst.msk [vmem:[#allocation2 + $0x1f8] sm:$0xff] %vm313, 0.0
      $region40: #{fused_matmul.1} parent=35 // pred_fallthru
        _
      %v378 = vld [vmem:[#allocation2] sm:$0xff]
      %v379 = vld [vmem:[#allocation2 + $0x8] sm:$0xff]
      %v380 = vld [vmem:[#allocation2 + $0x10] sm:$0xff]
      %v381 = vld [vmem:[#allocation2 + $0x18] sm:$0xff]
      %v382 = vld [vmem:[#allocation2 + $0x20] sm:$0xff]
      %v383 = vld [vmem:[#allocation2 + $0x28] sm:$0xff]
      %v384 = vld [vmem:[#allocation2 + $0x30] sm:$0xff]
      %v385 = vld [vmem:[#allocation2 + $0x38] sm:$0xff]
      %v386 = vld [vmem:[#allocation2 + $0x40] sm:$0xff]
      %v387 = vld [vmem:[#allocation2 + $0x48] sm:$0xff]
      %v388 = vld [vmem:[#allocation2 + $0x50] sm:$0xff]
      %v389 = vld [vmem:[#allocation2 + $0x58] sm:$0xff]
      %v390 = vld [vmem:[#allocation2 + $0x60] sm:$0xff]
      %v391 = vld [vmem:[#allocation2 + $0x68] sm:$0xff]
      %v392 = vld [vmem:[#allocation2 + $0x70] sm:$0xff]
      %v393 = vld [vmem:[#allocation2 + $0x78] sm:$0xff]
      %v394 = vld [vmem:[#allocation2 + $0x80] sm:$0xff]
      %v395 = vld [vmem:[#allocation2 + $0x88] sm:$0xff]
      %v396 = vld [vmem:[#allocation2 + $0x90] sm:$0xff]
      %v397 = vld [vmem:[#allocation2 + $0x98] sm:$0xff]
      %v398 = vld [vmem:[#allocation2 + $0xa0] sm:$0xff]
      %v399 = vld [vmem:[#allocation2 + $0xa8] sm:$0xff]
      %v400 = vld [vmem:[#allocation2 + $0xb0] sm:$0xff]
      %v401 = vld [vmem:[#allocation2 + $0xb8] sm:$0xff]
      %v402 = vld [vmem:[#allocation2 + $0xc0] sm:$0xff]
      %v403 = vld [vmem:[#allocation2 + $0xc8] sm:$0xff]
      %v404 = vld [vmem:[#allocation2 + $0xd0] sm:$0xff]
      %v405 = vld [vmem:[#allocation2 + $0xd8] sm:$0xff]
      %v406 = vld [vmem:[#allocation2 + $0xe0] sm:$0xff]
      %v407 = vld [vmem:[#allocation2 + $0xe8] sm:$0xff]
      %v408 = vld [vmem:[#allocation2 + $0xf0] sm:$0xff]
      %v409 = vld [vmem:[#allocation2 + $0xf8] sm:$0xff]
      %v410 = vld [vmem:[#allocation2 + $0x100] sm:$0xff]
      %v411 = vld [vmem:[#allocation2 + $0x108] sm:$0xff]
      %v412 = vld [vmem:[#allocation2 + $0x110] sm:$0xff]
      %v413 = vld [vmem:[#allocation2 + $0x118] sm:$0xff]
      %v414 = vld [vmem:[#allocation2 + $0x120] sm:$0xff]
      %v415 = vld [vmem:[#allocation2 + $0x128] sm:$0xff]
      %v416 = vld [vmem:[#allocation2 + $0x130] sm:$0xff]
      %v417 = vld [vmem:[#allocation2 + $0x138] sm:$0xff]
      %v418 = vld [vmem:[#allocation2 + $0x140] sm:$0xff]
      %v419 = vld [vmem:[#allocation2 + $0x148] sm:$0xff]
      %v420 = vld [vmem:[#allocation2 + $0x150] sm:$0xff]
      %v421 = vld [vmem:[#allocation2 + $0x158] sm:$0xff]
      %v422 = vld [vmem:[#allocation2 + $0x160] sm:$0xff]
      %v423 = vld [vmem:[#allocation2 + $0x168] sm:$0xff]
      %v424 = vld [vmem:[#allocation2 + $0x170] sm:$0xff]
      %v425 = vld [vmem:[#allocation2 + $0x178] sm:$0xff]
      %v426 = vld [vmem:[#allocation2 + $0x180] sm:$0xff]
      %v427 = vld [vmem:[#allocation2 + $0x188] sm:$0xff]
      %v428 = vld [vmem:[#allocation2 + $0x190] sm:$0xff]
      %v429 = vld [vmem:[#allocation2 + $0x198] sm:$0xff]
      %v430 = vld [vmem:[#allocation2 + $0x1a0] sm:$0xff]
      %v431 = vld [vmem:[#allocation2 + $0x1a8] sm:$0xff]
      %v432 = vld [vmem:[#allocation2 + $0x1b0] sm:$0xff]
      %v433 = vld [vmem:[#allocation2 + $0x1b8] sm:$0xff]
      %v434 = vld [vmem:[#allocation2 + $0x1c0] sm:$0xff]
      %v435 = vld [vmem:[#allocation2 + $0x1c8] sm:$0xff]
      %v436 = vld [vmem:[#allocation2 + $0x1d0] sm:$0xff]
      %v437 = vld [vmem:[#allocation2 + $0x1d8] sm:$0xff]
      %v438 = vld [vmem:[#allocation2 + $0x1e0] sm:$0xff]
      %v439 = vld [vmem:[#allocation2 + $0x1e8] sm:$0xff]
      %v440 = vld [vmem:[#allocation2 + $0x1f0] sm:$0xff]
      %v441 = vld [vmem:[#allocation2 + $0x1f8] sm:$0xff]
      %v442 = vld [vmem:[%s281] sm:$0xff]
      %v443 = vld [vmem:[%s281 + $0x8] sm:$0xff]
      %v444 = vld [vmem:[%s281 + $0x10] sm:$0xff]
      %v445 = vld [vmem:[%s281 + $0x18] sm:$0xff]
      %v446 = vld [vmem:[%s281 + $0x20] sm:$0xff]
      %v447 = vld [vmem:[%s281 + $0x28] sm:$0xff]
      %v448 = vld [vmem:[%s281 + $0x30] sm:$0xff]
      %v449 = vld [vmem:[%s281 + $0x38] sm:$0xff]
      %v450 = vld [vmem:[%s281 + $0x40] sm:$0xff]
      %v451 = vld [vmem:[%s281 + $0x48] sm:$0xff]
      %v452 = vld [vmem:[%s281 + $0x50] sm:$0xff]
      %v453 = vld [vmem:[%s281 + $0x58] sm:$0xff]
      %v454 = vld [vmem:[%s281 + $0x60] sm:$0xff]
      %v455 = vld [vmem:[%s281 + $0x68] sm:$0xff]
      %v456 = vld [vmem:[%s281 + $0x70] sm:$0xff]
      %v457 = vld [vmem:[%s281 + $0x78] sm:$0xff]
      %v458 = vld [vmem:[%s281 + $0x80] sm:$0xff]
      %v459 = vld [vmem:[%s281 + $0x88] sm:$0xff]
      %v460 = vld [vmem:[%s281 + $0x90] sm:$0xff]
      %v461 = vld [vmem:[%s281 + $0x98] sm:$0xff]
      %v462 = vld [vmem:[%s281 + $0xa0] sm:$0xff]
      %v463 = vld [vmem:[%s281 + $0xa8] sm:$0xff]
      %v464 = vld [vmem:[%s281 + $0xb0] sm:$0xff]
      %v465 = vld [vmem:[%s281 + $0xb8] sm:$0xff]
      %v466 = vld [vmem:[%s281 + $0xc0] sm:$0xff]
      %v467 = vld [vmem:[%s281 + $0xc8] sm:$0xff]
      %v468 = vld [vmem:[%s281 + $0xd0] sm:$0xff]
      %v469 = vld [vmem:[%s281 + $0xd8] sm:$0xff]
      %v470 = vld [vmem:[%s281 + $0xe0] sm:$0xff]
      %v471 = vld [vmem:[%s281 + $0xe8] sm:$0xff]
      %v472 = vld [vmem:[%s281 + $0xf0] sm:$0xff]
      %v473 = vld [vmem:[%s281 + $0xf8] sm:$0xff]
      %v474 = vld [vmem:[%s281 + $0x100] sm:$0xff]
      %v475 = vld [vmem:[%s281 + $0x108] sm:$0xff]
      %v476 = vld [vmem:[%s281 + $0x110] sm:$0xff]
      %v477 = vld [vmem:[%s281 + $0x118] sm:$0xff]
      %v478 = vld [vmem:[%s281 + $0x120] sm:$0xff]
      %v479 = vld [vmem:[%s281 + $0x128] sm:$0xff]
      %v480 = vld [vmem:[%s281 + $0x130] sm:$0xff]
      %v481 = vld [vmem:[%s281 + $0x138] sm:$0xff]
      %v482 = vld [vmem:[%s281 + $0x140] sm:$0xff]
      %v483 = vld [vmem:[%s281 + $0x148] sm:$0xff]
      %v484 = vld [vmem:[%s281 + $0x150] sm:$0xff]
      %v485 = vld [vmem:[%s281 + $0x158] sm:$0xff]
      %v486 = vld [vmem:[%s281 + $0x160] sm:$0xff]
      %v487 = vld [vmem:[%s281 + $0x168] sm:$0xff]
      %v488 = vld [vmem:[%s281 + $0x170] sm:$0xff]
      %v489 = vld [vmem:[%s281 + $0x178] sm:$0xff]
      %v490 = vld [vmem:[%s281 + $0x180] sm:$0xff]
      %v491 = vld [vmem:[%s281 + $0x188] sm:$0xff]
      %v492 = vld [vmem:[%s281 + $0x190] sm:$0xff]
      %v493 = vld [vmem:[%s281 + $0x198] sm:$0xff]
      %v494 = vld [vmem:[%s281 + $0x1a0] sm:$0xff]
      %v495 = vld [vmem:[%s281 + $0x1a8] sm:$0xff]
      %v496 = vld [vmem:[%s281 + $0x1b0] sm:$0xff]
      %v497 = vld [vmem:[%s281 + $0x1b8] sm:$0xff]
      %v498 = vld [vmem:[%s281 + $0x1c0] sm:$0xff]
      %v499 = vld [vmem:[%s281 + $0x1c8] sm:$0xff]
      %v500 = vld [vmem:[%s281 + $0x1d0] sm:$0xff]
      %v501 = vld [vmem:[%s281 + $0x1d8] sm:$0xff]
      %v502 = vld [vmem:[%s281 + $0x1e0] sm:$0xff]
      %v503 = vld [vmem:[%s281 + $0x1e8] sm:$0xff]
      %v504 = vld [vmem:[%s281 + $0x1f0] sm:$0xff]
      %v505 = vld [vmem:[%s281 + $0x1f8] sm:$0xff]
      %v506 = vld [vmem:[%s291] sm:$0xf]
      %v507 = vld [vmem:[%s291 + $0x4] sm:$0xf]
      %v508 = vld [vmem:[%s291 + $0x8] sm:$0xf]
      %v509 = vld [vmem:[%s291 + $0xc] sm:$0xf]
      %v510 = vld [vmem:[%s291 + $0x10] sm:$0xf]
      %v511 = vld [vmem:[%s291 + $0x14] sm:$0xf]
      %v512 = vld [vmem:[%s291 + $0x18] sm:$0xf]
      %v513 = vld [vmem:[%s291 + $0x1c] sm:$0xf]
      %v514 = vld [vmem:[%s291 + $0x20] sm:$0xf]
      %v515 = vld [vmem:[%s291 + $0x24] sm:$0xf]
      %v516 = vld [vmem:[%s291 + $0x28] sm:$0xf]
      %v517 = vld [vmem:[%s291 + $0x2c] sm:$0xf]
      %v518 = vld [vmem:[%s291 + $0x30] sm:$0xf]
      %v519 = vld [vmem:[%s291 + $0x34] sm:$0xf]
      %v520 = vld [vmem:[%s291 + $0x38] sm:$0xf]
      %v521 = vld [vmem:[%s291 + $0x3c] sm:$0xf]
      %v522 = vld [vmem:[%s291 + $0x40] sm:$0xf]
      %v523 = vld [vmem:[%s291 + $0x44] sm:$0xf]
      %v524 = vld [vmem:[%s291 + $0x48] sm:$0x3]
      %v589 = vunpack.c.l.b16 %v442
      %v590 = vunpack.c.h.b16 %v442
      %v591 = vunpack.c.l.b16 %v443
      %v592 = vunpack.c.h.b16 %v443
      %v593 = vunpack.c.l.b16 %v444
      %v594 = vunpack.c.h.b16 %v444
      %v595 = vunpack.c.l.b16 %v445
      %v596 = vunpack.c.h.b16 %v445
      %v597 = vunpack.c.l.b16 %v446
      %v598 = vunpack.c.h.b16 %v446
      %v599 = vunpack.c.l.b16 %v447
      %v600 = vunpack.c.h.b16 %v447
      %v601 = vunpack.c.l.b16 %v448
      %v602 = vunpack.c.h.b16 %v448
      %v603 = vunpack.c.l.b16 %v449
      %v604 = vunpack.c.h.b16 %v449
      %v605 = vunpack.c.l.b16 %v450
      %v606 = vunpack.c.h.b16 %v450
      %v607 = vunpack.c.l.b16 %v451
      %v608 = vunpack.c.h.b16 %v451
      %v609 = vunpack.c.l.b16 %v452
      %v610 = vunpack.c.h.b16 %v452
      %v611 = vunpack.c.l.b16 %v453
      %v612 = vunpack.c.h.b16 %v453
      %v613 = vunpack.c.l.b16 %v454
      %v614 = vunpack.c.h.b16 %v454
      %v615 = vunpack.c.l.b16 %v455
      %v616 = vunpack.c.h.b16 %v455
      %v617 = vunpack.c.l.b16 %v456
      %v618 = vunpack.c.h.b16 %v456
      %v619 = vunpack.c.l.b16 %v457
      %v620 = vunpack.c.h.b16 %v457
      %v621 = vunpack.c.l.b16 %v458
      %v622 = vunpack.c.h.b16 %v458
      %v623 = vunpack.c.l.b16 %v459
      %v624 = vunpack.c.h.b16 %v459
      %v625 = vunpack.c.l.b16 %v460
      %v626 = vunpack.c.h.b16 %v460
      %v627 = vunpack.c.l.b16 %v461
      %v628 = vunpack.c.h.b16 %v461
      %v629 = vunpack.c.l.b16 %v462
      %v630 = vunpack.c.h.b16 %v462
      %v631 = vunpack.c.l.b16 %v463
      %v632 = vunpack.c.h.b16 %v463
      %v633 = vunpack.c.l.b16 %v464
      %v634 = vunpack.c.h.b16 %v464
      %v635 = vunpack.c.l.b16 %v465
      %v636 = vunpack.c.h.b16 %v465
      %v637 = vunpack.c.l.b16 %v466
      %v638 = vunpack.c.h.b16 %v466
      %v639 = vunpack.c.l.b16 %v467
      %v640 = vunpack.c.h.b16 %v467
      %v641 = vunpack.c.l.b16 %v468
      %v642 = vunpack.c.h.b16 %v468
      %v643 = vunpack.c.l.b16 %v469
      %v644 = vunpack.c.h.b16 %v469
      %v645 = vunpack.c.l.b16 %v470
      %v646 = vunpack.c.h.b16 %v470
      %v647 = vunpack.c.l.b16 %v471
      %v648 = vunpack.c.h.b16 %v471
      %v649 = vunpack.c.l.b16 %v472
      %v650 = vunpack.c.h.b16 %v472
      %v651 = vunpack.c.l.b16 %v473
      %v652 = vunpack.c.h.b16 %v473
      %v653 = vunpack.c.l.b16 %v474
      %v654 = vunpack.c.h.b16 %v474
      %v655 = vunpack.c.l.b16 %v475
      %v656 = vunpack.c.h.b16 %v475
      %v657 = vunpack.c.l.b16 %v476
      %v658 = vunpack.c.h.b16 %v476
      %v659 = vunpack.c.l.b16 %v477
      %v660 = vunpack.c.h.b16 %v477
      %v661 = vunpack.c.l.b16 %v478
      %v662 = vunpack.c.h.b16 %v478
      %v663 = vunpack.c.l.b16 %v479
      %v664 = vunpack.c.h.b16 %v479
      %v665 = vunpack.c.l.b16 %v480
      %v666 = vunpack.c.h.b16 %v480
      %v667 = vunpack.c.l.b16 %v481
      %v668 = vunpack.c.h.b16 %v481
      %v669 = vunpack.c.l.b16 %v482
      %v670 = vunpack.c.h.b16 %v482
      %v671 = vunpack.c.l.b16 %v483
      %v672 = vunpack.c.h.b16 %v483
      %v673 = vunpack.c.l.b16 %v484
      %v674 = vunpack.c.h.b16 %v484
      %v675 = vunpack.c.l.b16 %v485
      %v676 = vunpack.c.h.b16 %v485
      %v677 = vunpack.c.l.b16 %v486
      %v678 = vunpack.c.h.b16 %v486
      %v679 = vunpack.c.l.b16 %v487
      %v680 = vunpack.c.h.b16 %v487
      %v681 = vunpack.c.l.b16 %v488
      %v682 = vunpack.c.h.b16 %v488
      %v683 = vunpack.c.l.b16 %v489
      %v684 = vunpack.c.h.b16 %v489
      %v685 = vunpack.c.l.b16 %v490
      %v686 = vunpack.c.h.b16 %v490
      %v687 = vunpack.c.l.b16 %v491
      %v688 = vunpack.c.h.b16 %v491
      %v689 = vunpack.c.l.b16 %v492
      %v690 = vunpack.c.h.b16 %v492
      %v691 = vunpack.c.l.b16 %v493
      %v692 = vunpack.c.h.b16 %v493
      %v693 = vunpack.c.l.b16 %v494
      %v694 = vunpack.c.h.b16 %v494
      %v695 = vunpack.c.l.b16 %v495
      %v696 = vunpack.c.h.b16 %v495
      %v697 = vunpack.c.l.b16 %v496
      %v698 = vunpack.c.h.b16 %v496
      %v699 = vunpack.c.l.b16 %v497
      %v700 = vunpack.c.h.b16 %v497
      %v701 = vunpack.c.l.b16 %v498
      %v702 = vunpack.c.h.b16 %v498
      %v703 = vunpack.c.l.b16 %v499
      %v704 = vunpack.c.h.b16 %v499
      %v705 = vunpack.c.l.b16 %v500
      %v706 = vunpack.c.h.b16 %v500
      %v707 = vunpack.c.l.b16 %v501
      %v708 = vunpack.c.h.b16 %v501
      %v709 = vunpack.c.l.b16 %v502
      %v710 = vunpack.c.h.b16 %v502
      %v711 = vunpack.c.l.b16 %v503
      %v712 = vunpack.c.h.b16 %v503
      %v713 = vunpack.c.l.b16 %v504
      %v714 = vunpack.c.h.b16 %v504
      %v715 = vunpack.c.l.b16 %v505
      %v716 = vunpack.c.h.b16 %v505
      %v717 = vpack.c.b16 %v591, %v589
      %v718 = vpack.c.b16 %v592, %v590
      %v719 = vpack.c.b16 %v595, %v593
      %v720 = vpack.c.b16 %v596, %v594
      %v721 = vpack.c.b16 %v599, %v597
      %v722 = vpack.c.b16 %v600, %v598
      %v723 = vpack.c.b16 %v603, %v601
      %v724 = vpack.c.b16 %v604, %v602
      %v725 = vpack.c.b16 %v607, %v605
      %v726 = vpack.c.b16 %v608, %v606
      %v727 = vpack.c.b16 %v611, %v609
      %v728 = vpack.c.b16 %v612, %v610
      %v729 = vpack.c.b16 %v615, %v613
      %v730 = vpack.c.b16 %v616, %v614
      %v731 = vpack.c.b16 %v619, %v617
      %v732 = vpack.c.b16 %v620, %v618
      %v733 = vpack.c.b16 %v623, %v621
      %v734 = vpack.c.b16 %v624, %v622
      %v735 = vpack.c.b16 %v627, %v625
      %v736 = vpack.c.b16 %v628, %v626
      %v737 = vpack.c.b16 %v631, %v629
      %v738 = vpack.c.b16 %v632, %v630
      %v739 = vpack.c.b16 %v635, %v633
      %v740 = vpack.c.b16 %v636, %v634
      %v741 = vpack.c.b16 %v639, %v637
      %v742 = vpack.c.b16 %v640, %v638
      %v743 = vpack.c.b16 %v643, %v641
      %v744 = vpack.c.b16 %v644, %v642
      %v745 = vpack.c.b16 %v647, %v645
      %v746 = vpack.c.b16 %v648, %v646
      %v747 = vpack.c.b16 %v651, %v649
      %v748 = vpack.c.b16 %v652, %v650
      %v749 = vpack.c.b16 %v655, %v653
      %v750 = vpack.c.b16 %v656, %v654
      %v751 = vpack.c.b16 %v659, %v657
      %v752 = vpack.c.b16 %v660, %v658
      %v753 = vpack.c.b16 %v663, %v661
      %v754 = vpack.c.b16 %v664, %v662
      %v755 = vpack.c.b16 %v667, %v665
      %v756 = vpack.c.b16 %v668, %v666
      %v757 = vpack.c.b16 %v671, %v669
      %v758 = vpack.c.b16 %v672, %v670
      %v759 = vpack.c.b16 %v675, %v673
      %v760 = vpack.c.b16 %v676, %v674
      %v761 = vpack.c.b16 %v679, %v677
      %v762 = vpack.c.b16 %v680, %v678
      %v763 = vpack.c.b16 %v683, %v681
      %v764 = vpack.c.b16 %v684, %v682
      %v765 = vpack.c.b16 %v687, %v685
      %v766 = vpack.c.b16 %v688, %v686
      %v767 = vpack.c.b16 %v691, %v689
      %v768 = vpack.c.b16 %v692, %v690
      %v769 = vpack.c.b16 %v695, %v693
      %v770 = vpack.c.b16 %v696, %v694
      %v771 = vpack.c.b16 %v699, %v697
      %v772 = vpack.c.b16 %v700, %v698
      %v773 = vpack.c.b16 %v703, %v701
      %v774 = vpack.c.b16 %v704, %v702
      %v775 = vpack.c.b16 %v707, %v705
      %v776 = vpack.c.b16 %v708, %v706
      %v777 = vpack.c.b16 %v711, %v709
      %v778 = vpack.c.b16 %v712, %v710
      %v779 = vpack.c.b16 %v715, %v713
      %v780 = vpack.c.b16 %v716, %v714
      %v832 = vunpack.c.l.b16 %v506
      %v833 = vunpack.c.l.b16 %v507
      %v834 = vunpack.c.l.b16 %v508
      %v835 = vunpack.c.l.b16 %v509
      %v836 = vunpack.c.l.b16 %v510
      %v837 = vunpack.c.l.b16 %v511
      %v838 = vunpack.c.l.b16 %v512
      %v839 = vunpack.c.l.b16 %v513
      %v840 = vunpack.c.l.b16 %v514
      %v841 = vunpack.c.l.b16 %v515
      %v842 = vunpack.c.l.b16 %v516
      %v843 = vunpack.c.l.b16 %v517
      %v844 = vunpack.c.l.b16 %v518
      %v845 = vunpack.c.l.b16 %v519
      %v846 = vunpack.c.l.b16 %v520
      %v847 = vunpack.c.l.b16 %v521
      %v848 = vunpack.c.l.b16 %v522
      %v849 = vunpack.c.l.b16 %v523
      %v850 = vunpack.c.l.b16 %v524
      %v851 = vpack.c.b16 %v833, %v832
      %v852 = vpack.c.b16 %v835, %v834
      %v853 = vpack.c.b16 %v837, %v836
      %v854 = vpack.c.b16 %v839, %v838
      %v855 = vpack.c.b16 %v841, %v840
      %v856 = vpack.c.b16 %v843, %v842
      %v857 = vpack.c.b16 %v845, %v844
      %v858 = vpack.c.b16 %v847, %v846
      %v859 = vpack.c.b16 %v849, %v848
      %v860 = vpack.c.b16 %v850, %v850
      %vm870 = vcmask 154624
      %v872 = vsel %vm870, %v718, 0
      %v875 = vsel %vm870, %v720, 0
      %v878 = vsel %vm870, %v722, 0
      %v881 = vsel %vm870, %v724, 0
      %v884 = vsel %vm870, %v726, 0
      %v887 = vsel %vm870, %v728, 0
      %v890 = vsel %vm870, %v730, 0
      %v893 = vsel %vm870, %v732, 0
      %v896 = vsel %vm870, %v734, 0
      %v899 = vsel %vm870, %v736, 0
      %v902 = vsel %vm870, %v738, 0
      %v905 = vsel %vm870, %v740, 0
      %v908 = vsel %vm870, %v742, 0
      %v911 = vsel %vm870, %v744, 0
      %v914 = vsel %vm870, %v746, 0
      %v917 = vsel %vm870, %v748, 0
      %v920 = vsel %vm870, %v750, 0
      %v923 = vsel %vm870, %v752, 0
      %v926 = vsel %vm870, %v754, 0
      %v929 = vsel %vm870, %v756, 0
      %v932 = vsel %vm870, %v758, 0
      %v935 = vsel %vm870, %v760, 0
      %v938 = vsel %vm870, %v762, 0
      %v941 = vsel %vm870, %v764, 0
      %v944 = vsel %vm870, %v766, 0
      %v947 = vsel %vm870, %v768, 0
      %v950 = vsel %vm870, %v770, 0
      %v953 = vsel %vm870, %v772, 0
      %v956 = vsel %vm870, %v774, 0
      %v959 = vsel %vm870, %v776, 0
      %v962 = vsel %vm870, %v778, 0
      %v965 = vsel %vm870, %v780, 0
      %vm967 = vcmask 1040384
      %vm968 = vcmask 1041408
      %v969 = vsel %vm967, 4294967295, 65535
      %v970 = vsel %vm968, %v969, 0
      %v972 = vand.u32 %v860, %v970
      %974 = vmatprep.subr.bf16.mxu0 0
      %975 = vmatpush1.bf16.msra.mxu0 %v851
      %976 = vmatprep.subr.bf16.mxu0 0
      %977 = vmatpush1.bf16.msra.mxu0 %v852
      %978 = vmatprep.subr.bf16.mxu0 0
      %979 = vmatpush1.bf16.msra.mxu0 %v853
      %980 = vmatprep.subr.bf16.mxu0 0
      %981 = vmatpush1.bf16.msra.mxu0 %v854
      %982 = vmatprep.subr.bf16.mxu0 0
      %983 = vmatpush1.bf16.msra.mxu0 %v855
      %984 = vmatprep.subr.bf16.mxu0 0
      %985 = vmatpush1.bf16.msra.mxu0 %v856
      %986 = vmatprep.subr.bf16.mxu0 0
      %987 = vmatpush1.bf16.msra.mxu0 %v857
      %988 = vmatprep.subr.bf16.mxu0 0
      %989 = vmatpush1.bf16.msra.mxu0 %v858
      %990 = vmatprep.subr.bf16.mxu0 0
      %991 = vmatpush1.bf16.msra.mxu0 %v859
      %992 = vmatprep.subr.bf16.mxu0 0
      %993 = vmatpush1.bf16.msra.mxu0 %v972
      %994 = vmatprep.subr.bf16.mxu0 0
      %995 = vmatpush1.bf16.msra.mxu0 0
      %996 = vmatprep.subr.bf16.mxu0 0
      %997 = vmatpush1.bf16.msra.mxu0 0
      %998 = vmatprep.subr.bf16.mxu0 0
      %999 = vmatpush1.bf16.msra.mxu0 0
      %1000 = vmatprep.subr.bf16.mxu0 0
      %1001 = vmatpush1.bf16.msra.mxu0 0
      %1002 = vmatprep.subr.bf16.mxu0 0
      %1003 = vmatpush1.bf16.msra.mxu0 0
      %1004 = vmatprep.subr.bf16.mxu0 0
      %1005 = vmatpush1.bf16.msra.mxu0 0
      %1006 = vmatprep.mubr.bf16.mxu0 %v872
      %1007 = vmatmul.mubr.bf16.gmra.mrb[0].mxu0 %v717
      %v1008 = vpop.f32.mrb[0].mxu0
      %v1009 = vadd.f32 0.0, %v1008
      %v1010 = vpop.f32.mrb[0].mxu0
      %v1011 = vpop.f32.mrb[0].mxu0
      %v1012 = vadd.f32 0.0, %v1011
      %v1013 = vpop.f32.mrb[0].mxu0
      %1014 = vmatprep.mubr.bf16.mxu0 %v875
      %1015 = vmatmul.mubr.bf16.gmra.mrb[0].mxu0 %v719
      %v1016 = vpop.f32.mrb[0].mxu0
      %v1017 = vadd.f32 0.0, %v1016
      %v1018 = vpop.f32.mrb[0].mxu0
      %v1019 = vpop.f32.mrb[0].mxu0
      %v1020 = vadd.f32 0.0, %v1019
      %v1021 = vpop.f32.mrb[0].mxu0
      %1022 = vmatprep.mubr.bf16.mxu0 %v878
      %1023 = vmatmul.mubr.bf16.gmra.mrb[0].mxu0 %v721
      %v1024 = vpop.f32.mrb[0].mxu0
      %v1025 = vadd.f32 0.0, %v1024
      %v1026 = vpop.f32.mrb[0].mxu0
      %v1027 = vpop.f32.mrb[0].mxu0
      %v1028 = vadd.f32 0.0, %v1027
      %v1029 = vpop.f32.mrb[0].mxu0
      %1030 = vmatprep.mubr.bf16.mxu0 %v881
      %1031 = vmatmul.mubr.bf16.gmra.mrb[0].mxu0 %v723
      %v1032 = vpop.f32.mrb[0].mxu0
      %v1033 = vadd.f32 0.0, %v1032
      %v1034 = vpop.f32.mrb[0].mxu0
      %v1035 = vpop.f32.mrb[0].mxu0
      %v1036 = vadd.f32 0.0, %v1035
      %v1037 = vpop.f32.mrb[0].mxu0
      %1038 = vmatprep.mubr.bf16.mxu0 %v884
      %1039 = vmatmul.mubr.bf16.gmra.mrb[0].mxu0 %v725
      %v1040 = vpop.f32.mrb[0].mxu0
      %v1041 = vadd.f32 0.0, %v1040
      %v1042 = vpop.f32.mrb[0].mxu0
      %v1043 = vpop.f32.mrb[0].mxu0
      %v1044 = vadd.f32 0.0, %v1043
      %v1045 = vpop.f32.mrb[0].mxu0
      %1046 = vmatprep.mubr.bf16.mxu0 %v887
      %1047 = vmatmul.mubr.bf16.gmra.mrb[0].mxu0 %v727
      %v1048 = vpop.f32.mrb[0].mxu0
      %v1049 = vadd.f32 0.0, %v1048
      %v1050 = vpop.f32.mrb[0].mxu0
      %v1051 = vpop.f32.mrb[0].mxu0
      %v1052 = vadd.f32 0.0, %v1051
      %v1053 = vpop.f32.mrb[0].mxu0
      %1054 = vmatprep.mubr.bf16.mxu0 %v890
      %1055 = vmatmul.mubr.bf16.gmra.mrb[0].mxu0 %v729
      %v1056 = vpop.f32.mrb[0].mxu0
      %v1057 = vadd.f32 0.0, %v1056
      %v1058 = vpop.f32.mrb[0].mxu0
      %v1059 = vpop.f32.mrb[0].mxu0
      %v1060 = vadd.f32 0.0, %v1059
      %v1061 = vpop.f32.mrb[0].mxu0
      %1062 = vmatprep.mubr.bf16.mxu0 %v893
      %1063 = vmatmul.mubr.bf16.gmra.mrb[0].mxu0 %v731
      %v1064 = vpop.f32.mrb[0].mxu0
      %v1065 = vadd.f32 0.0, %v1064
      %v1066 = vpop.f32.mrb[0].mxu0
      %v1067 = vpop.f32.mrb[0].mxu0
      %v1068 = vadd.f32 0.0, %v1067
      %v1069 = vpop.f32.mrb[0].mxu0
      %1070 = vmatprep.mubr.bf16.mxu0 %v896
      %1071 = vmatmul.mubr.bf16.gmra.mrb[0].mxu0 %v733
      %v1072 = vpop.f32.mrb[0].mxu0
      %v1073 = vadd.f32 0.0, %v1072
      %v1074 = vpop.f32.mrb[0].mxu0
      %v1075 = vpop.f32.mrb[0].mxu0
      %v1076 = vadd.f32 0.0, %v1075
      %v1077 = vpop.f32.mrb[0].mxu0
      %1078 = vmatprep.mubr.bf16.mxu0 %v899
      %1079 = vmatmul.mubr.bf16.gmra.mrb[0].mxu0 %v735
      %v1080 = vpop.f32.mrb[0].mxu0
      %v1081 = vadd.f32 0.0, %v1080
      %v1082 = vpop.f32.mrb[0].mxu0
      %v1083 = vpop.f32.mrb[0].mxu0
      %v1084 = vadd.f32 0.0, %v1083
      %v1085 = vpop.f32.mrb[0].mxu0
      %1086 = vmatprep.mubr.bf16.mxu0 %v902
      %1087 = vmatmul.mubr.bf16.gmra.mrb[0].mxu0 %v737
      %v1088 = vpop.f32.mrb[0].mxu0
      %v1089 = vadd.f32 0.0, %v1088
      %v1090 = vpop.f32.mrb[0].mxu0
      %v1091 = vpop.f32.mrb[0].mxu0
      %v1092 = vadd.f32 0.0, %v1091
      %v1093 = vpop.f32.mrb[0].mxu0
      %1094 = vmatprep.mubr.bf16.mxu0 %v905
      %1095 = vmatmul.mubr.bf16.gmra.mrb[0].mxu0 %v739
      %v1096 = vpop.f32.mrb[0].mxu0
      %v1097 = vadd.f32 0.0, %v1096
      %v1098 = vpop.f32.mrb[0].mxu0
      %v1099 = vpop.f32.mrb[0].mxu0
      %v1100 = vadd.f32 0.0, %v1099
      %v1101 = vpop.f32.mrb[0].mxu0
      %1102 = vmatprep.mubr.bf16.mxu0 %v908
      %1103 = vmatmul.mubr.bf16.gmra.mrb[0].mxu0 %v741
      %v1104 = vpop.f32.mrb[0].mxu0
      %v1105 = vadd.f32 0.0, %v1104
      %v1106 = vpop.f32.mrb[0].mxu0
      %v1107 = vpop.f32.mrb[0].mxu0
      %v1108 = vadd.f32 0.0, %v1107
      %v1109 = vpop.f32.mrb[0].mxu0
      %1110 = vmatprep.mubr.bf16.mxu0 %v911
      %1111 = vmatmul.mubr.bf16.gmra.mrb[0].mxu0 %v743
      %v1112 = vpop.f32.mrb[0].mxu0
      %v1113 = vadd.f32 0.0, %v1112
      %v1114 = vpop.f32.mrb[0].mxu0
      %v1115 = vpop.f32.mrb[0].mxu0
      %v1116 = vadd.f32 0.0, %v1115
      %v1117 = vpop.f32.mrb[0].mxu0
      %1118 = vmatprep.mubr.bf16.mxu0 %v914
      %1119 = vmatmul.mubr.bf16.gmra.mrb[0].mxu0 %v745
      %v1120 = vpop.f32.mrb[0].mxu0
      %v1121 = vadd.f32 0.0, %v1120
      %v1122 = vpop.f32.mrb[0].mxu0
      %v1123 = vpop.f32.mrb[0].mxu0
      %v1124 = vadd.f32 0.0, %v1123
      %v1125 = vpop.f32.mrb[0].mxu0
      %1126 = vmatprep.mubr.bf16.mxu0 %v917
      %1127 = vmatmul.mubr.bf16.gmra.mrb[0].mxu0 %v747
      %v1128 = vpop.f32.mrb[0].mxu0
      %v1129 = vadd.f32 0.0, %v1128
      %v1130 = vpop.f32.mrb[0].mxu0
      %v1131 = vpop.f32.mrb[0].mxu0
      %v1132 = vadd.f32 0.0, %v1131
      %v1133 = vpop.f32.mrb[0].mxu0
      %1134 = vmatprep.mubr.bf16.mxu0 %v920
      %1135 = vmatmul.mubr.bf16.gmra.mrb[0].mxu0 %v749
      %v1136 = vpop.f32.mrb[0].mxu0
      %v1137 = vadd.f32 0.0, %v1136
      %v1138 = vpop.f32.mrb[0].mxu0
      %v1139 = vpop.f32.mrb[0].mxu0
      %v1140 = vadd.f32 0.0, %v1139
      %v1141 = vpop.f32.mrb[0].mxu0
      %1142 = vmatprep.mubr.bf16.mxu0 %v923
      %1143 = vmatmul.mubr.bf16.gmra.mrb[0].mxu0 %v751
      %v1144 = vpop.f32.mrb[0].mxu0
      %v1145 = vadd.f32 0.0, %v1144
      %v1146 = vpop.f32.mrb[0].mxu0
      %v1147 = vpop.f32.mrb[0].mxu0
      %v1148 = vadd.f32 0.0, %v1147
      %v1149 = vpop.f32.mrb[0].mxu0
      %1150 = vmatprep.mubr.bf16.mxu0 %v926
      %1151 = vmatmul.mubr.bf16.gmra.mrb[0].mxu0 %v753
      %v1152 = vpop.f32.mrb[0].mxu0
      %v1153 = vadd.f32 0.0, %v1152
      %v1154 = vpop.f32.mrb[0].mxu0
      %v1155 = vpop.f32.mrb[0].mxu0
      %v1156 = vadd.f32 0.0, %v1155
      %v1157 = vpop.f32.mrb[0].mxu0
      %1158 = vmatprep.mubr.bf16.mxu0 %v929
      %1159 = vmatmul.mubr.bf16.gmra.mrb[0].mxu0 %v755
      %v1160 = vpop.f32.mrb[0].mxu0
      %v1161 = vadd.f32 0.0, %v1160
      %v1162 = vpop.f32.mrb[0].mxu0
      %v1163 = vpop.f32.mrb[0].mxu0
      %v1164 = vadd.f32 0.0, %v1163
      %v1165 = vpop.f32.mrb[0].mxu0
      %1166 = vmatprep.mubr.bf16.mxu0 %v932
      %1167 = vmatmul.mubr.bf16.gmra.mrb[0].mxu0 %v757
      %v1168 = vpop.f32.mrb[0].mxu0
      %v1169 = vadd.f32 0.0, %v1168
      %v1170 = vpop.f32.mrb[0].mxu0
      %v1171 = vpop.f32.mrb[0].mxu0
      %v1172 = vadd.f32 0.0, %v1171
      %v1173 = vpop.f32.mrb[0].mxu0
      %1174 = vmatprep.mubr.bf16.mxu0 %v935
      %1175 = vmatmul.mubr.bf16.gmra.mrb[0].mxu0 %v759
      %v1176 = vpop.f32.mrb[0].mxu0
      %v1177 = vadd.f32 0.0, %v1176
      %v1178 = vpop.f32.mrb[0].mxu0
      %v1179 = vpop.f32.mrb[0].mxu0
      %v1180 = vadd.f32 0.0, %v1179
      %v1181 = vpop.f32.mrb[0].mxu0
      %1182 = vmatprep.mubr.bf16.mxu0 %v938
      %1183 = vmatmul.mubr.bf16.gmra.mrb[0].mxu0 %v761
      %v1184 = vpop.f32.mrb[0].mxu0
      %v1185 = vadd.f32 0.0, %v1184
      %v1186 = vpop.f32.mrb[0].mxu0
      %v1187 = vpop.f32.mrb[0].mxu0
      %v1188 = vadd.f32 0.0, %v1187
      %v1189 = vpop.f32.mrb[0].mxu0
      %1190 = vmatprep.mubr.bf16.mxu0 %v941
      %1191 = vmatmul.mubr.bf16.gmra.mrb[0].mxu0 %v763
      %v1192 = vpop.f32.mrb[0].mxu0
      %v1193 = vadd.f32 0.0, %v1192
      %v1194 = vpop.f32.mrb[0].mxu0
      %v1195 = vpop.f32.mrb[0].mxu0
      %v1196 = vadd.f32 0.0, %v1195
      %v1197 = vpop.f32.mrb[0].mxu0
      %1198 = vmatprep.mubr.bf16.mxu0 %v944
      %1199 = vmatmul.mubr.bf16.gmra.mrb[0].mxu0 %v765
      %v1200 = vpop.f32.mrb[0].mxu0
      %v1201 = vadd.f32 0.0, %v1200
      %v1202 = vpop.f32.mrb[0].mxu0
      %v1203 = vpop.f32.mrb[0].mxu0
      %v1204 = vadd.f32 0.0, %v1203
      %v1205 = vpop.f32.mrb[0].mxu0
      %1206 = vmatprep.mubr.bf16.mxu0 %v947
      %1207 = vmatmul.mubr.bf16.gmra.mrb[0].mxu0 %v767
      %v1208 = vpop.f32.mrb[0].mxu0
      %v1209 = vadd.f32 0.0, %v1208
      %v1210 = vpop.f32.mrb[0].mxu0
      %v1211 = vpop.f32.mrb[0].mxu0
      %v1212 = vadd.f32 0.0, %v1211
      %v1213 = vpop.f32.mrb[0].mxu0
      %1214 = vmatprep.mubr.bf16.mxu0 %v950
      %1215 = vmatmul.mubr.bf16.gmra.mrb[0].mxu0 %v769
      %v1216 = vpop.f32.mrb[0].mxu0
      %v1217 = vadd.f32 0.0, %v1216
      %v1218 = vpop.f32.mrb[0].mxu0
      %v1219 = vpop.f32.mrb[0].mxu0
      %v1220 = vadd.f32 0.0, %v1219
      %v1221 = vpop.f32.mrb[0].mxu0
      %1222 = vmatprep.mubr.bf16.mxu0 %v953
      %1223 = vmatmul.mubr.bf16.gmra.mrb[0].mxu0 %v771
      %v1224 = vpop.f32.mrb[0].mxu0
      %v1225 = vadd.f32 0.0, %v1224
      %v1226 = vpop.f32.mrb[0].mxu0
      %v1227 = vpop.f32.mrb[0].mxu0
      %v1228 = vadd.f32 0.0, %v1227
      %v1229 = vpop.f32.mrb[0].mxu0
      %1230 = vmatprep.mubr.bf16.mxu0 %v956
      %1231 = vmatmul.mubr.bf16.gmra.mrb[0].mxu0 %v773
      %v1232 = vpop.f32.mrb[0].mxu0
      %v1233 = vadd.f32 0.0, %v1232
      %v1234 = vpop.f32.mrb[0].mxu0
      %v1235 = vpop.f32.mrb[0].mxu0
      %v1236 = vadd.f32 0.0, %v1235
      %v1237 = vpop.f32.mrb[0].mxu0
      %1238 = vmatprep.mubr.bf16.mxu0 %v959
      %1239 = vmatmul.mubr.bf16.gmra.mrb[0].mxu0 %v775
      %v1240 = vpop.f32.mrb[0].mxu0
      %v1241 = vadd.f32 0.0, %v1240
      %v1242 = vpop.f32.mrb[0].mxu0
      %v1243 = vpop.f32.mrb[0].mxu0
      %v1244 = vadd.f32 0.0, %v1243
      %v1245 = vpop.f32.mrb[0].mxu0
      %1246 = vmatprep.mubr.bf16.mxu0 %v962
      %1247 = vmatmul.mubr.bf16.gmra.mrb[0].mxu0 %v777
      %v1248 = vpop.f32.mrb[0].mxu0
      %v1249 = vadd.f32 0.0, %v1248
      %v1250 = vpop.f32.mrb[0].mxu0
      %v1251 = vpop.f32.mrb[0].mxu0
      %v1252 = vadd.f32 0.0, %v1251
      %v1253 = vpop.f32.mrb[0].mxu0
      %1254 = vmatprep.mubr.bf16.mxu0 %v965
      %1255 = vmatmul.mubr.bf16.gmra.mrb[0].mxu0 %v779
      %v1256 = vpop.f32.mrb[0].mxu0
      %v1257 = vadd.f32 0.0, %v1256
      %v1258 = vpop.f32.mrb[0].mxu0
      %v1259 = vpop.f32.mrb[0].mxu0
      %v1260 = vadd.f32 0.0, %v1259
      %v1261 = vpop.f32.mrb[0].mxu0
      %1262 = vdwg.mxu0
      %v1263 = vadd.f32 %v378, %v1009
      %v1264 = vadd.f32 %v379, %v1012
      %v1265 = vadd.f32 %v380, %v1017
      %v1266 = vadd.f32 %v381, %v1020
      %v1267 = vadd.f32 %v382, %v1025
      %v1268 = vadd.f32 %v383, %v1028
      %v1269 = vadd.f32 %v384, %v1033
      %v1270 = vadd.f32 %v385, %v1036
      %v1271 = vadd.f32 %v386, %v1041
      %v1272 = vadd.f32 %v387, %v1044
      %v1273 = vadd.f32 %v388, %v1049
      %v1274 = vadd.f32 %v389, %v1052
      %v1275 = vadd.f32 %v390, %v1057
      %v1276 = vadd.f32 %v391, %v1060
      %v1277 = vadd.f32 %v392, %v1065
      %v1278 = vadd.f32 %v393, %v1068
      %v1279 = vadd.f32 %v394, %v1073
      %v1280 = vadd.f32 %v395, %v1076
      %v1281 = vadd.f32 %v396, %v1081
      %v1282 = vadd.f32 %v397, %v1084
      %v1283 = vadd.f32 %v398, %v1089
      %v1284 = vadd.f32 %v399, %v1092
      %v1285 = vadd.f32 %v400, %v1097
      %v1286 = vadd.f32 %v401, %v1100
      %v1287 = vadd.f32 %v402, %v1105
      %v1288 = vadd.f32 %v403, %v1108
      %v1289 = vadd.f32 %v404, %v1113
      %v1290 = vadd.f32 %v405, %v1116
      %v1291 = vadd.f32 %v406, %v1121
      %v1292 = vadd.f32 %v407, %v1124
      %v1293 = vadd.f32 %v408, %v1129
      %v1294 = vadd.f32 %v409, %v1132
      %v1295 = vadd.f32 %v410, %v1137
      %v1296 = vadd.f32 %v411, %v1140
      %v1297 = vadd.f32 %v412, %v1145
      %v1298 = vadd.f32 %v413, %v1148
      %v1299 = vadd.f32 %v414, %v1153
      %v1300 = vadd.f32 %v415, %v1156
      %v1301 = vadd.f32 %v416, %v1161
      %v1302 = vadd.f32 %v417, %v1164
      %v1303 = vadd.f32 %v418, %v1169
      %v1304 = vadd.f32 %v419, %v1172
      %v1305 = vadd.f32 %v420, %v1177
      %v1306 = vadd.f32 %v421, %v1180
      %v1307 = vadd.f32 %v422, %v1185
      %v1308 = vadd.f32 %v423, %v1188
      %v1309 = vadd.f32 %v424, %v1193
      %v1310 = vadd.f32 %v425, %v1196
      %v1311 = vadd.f32 %v426, %v1201
      %v1312 = vadd.f32 %v427, %v1204
      %v1313 = vadd.f32 %v428, %v1209
      %v1314 = vadd.f32 %v429, %v1212
      %v1315 = vadd.f32 %v430, %v1217
      %v1316 = vadd.f32 %v431, %v1220
      %v1317 = vadd.f32 %v432, %v1225
      %v1318 = vadd.f32 %v433, %v1228
      %v1319 = vadd.f32 %v434, %v1233
      %v1320 = vadd.f32 %v435, %v1236
      %v1321 = vadd.f32 %v436, %v1241
      %v1322 = vadd.f32 %v437, %v1244
      %v1323 = vadd.f32 %v438, %v1249
      %v1324 = vadd.f32 %v439, %v1252
      %v1325 = vadd.f32 %v440, %v1257
      %v1326 = vadd.f32 %v441, %v1260
      %vm1327 = vcmask 523264
      %1328 = vst.msk [vmem:[#allocation2] sm:$0xff] %vm1327, %v1263
      %1329 = vst.msk [vmem:[#allocation2 + $0x8] sm:$0xff] %vm1327, %v1264
      %1330 = vst.msk [vmem:[#allocation2 + $0x10] sm:$0xff] %vm1327, %v1265
      %1331 = vst.msk [vmem:[#allocation2 + $0x18] sm:$0xff] %vm1327, %v1266
      %1332 = vst.msk [vmem:[#allocation2 + $0x20] sm:$0xff] %vm1327, %v1267
      %1333 = vst.msk [vmem:[#allocation2 + $0x28] sm:$0xff] %vm1327, %v1268
      %1334 = vst.msk [vmem:[#allocation2 + $0x30] sm:$0xff] %vm1327, %v1269
      %1335 = vst.msk [vmem:[#allocation2 + $0x38] sm:$0xff] %vm1327, %v1270
      %1336 = vst.msk [vmem:[#allocation2 + $0x40] sm:$0xff] %vm1327, %v1271
      %1337 = vst.msk [vmem:[#allocation2 + $0x48] sm:$0xff] %vm1327, %v1272
      %1338 = vst.msk [vmem:[#allocation2 + $0x50] sm:$0xff] %vm1327, %v1273
      %1339 = vst.msk [vmem:[#allocation2 + $0x58] sm:$0xff] %vm1327, %v1274
      %1340 = vst.msk [vmem:[#allocation2 + $0x60] sm:$0xff] %vm1327, %v1275
      %1341 = vst.msk [vmem:[#allocation2 + $0x68] sm:$0xff] %vm1327, %v1276
      %1342 = vst.msk [vmem:[#allocation2 + $0x70] sm:$0xff] %vm1327, %v1277
      %1343 = vst.msk [vmem:[#allocation2 + $0x78] sm:$0xff] %vm1327, %v1278
      %1344 = vst.msk [vmem:[#allocation2 + $0x80] sm:$0xff] %vm1327, %v1279
      %1345 = vst.msk [vmem:[#allocation2 + $0x88] sm:$0xff] %vm1327, %v1280
      %1346 = vst.msk [vmem:[#allocation2 + $0x90] sm:$0xff] %vm1327, %v1281
      %1347 = vst.msk [vmem:[#allocation2 + $0x98] sm:$0xff] %vm1327, %v1282
      %1348 = vst.msk [vmem:[#allocation2 + $0xa0] sm:$0xff] %vm1327, %v1283
      %1349 = vst.msk [vmem:[#allocation2 + $0xa8] sm:$0xff] %vm1327, %v1284
      %1350 = vst.msk [vmem:[#allocation2 + $0xb0] sm:$0xff] %vm1327, %v1285
      %1351 = vst.msk [vmem:[#allocation2 + $0xb8] sm:$0xff] %vm1327, %v1286
      %1352 = vst.msk [vmem:[#allocation2 + $0xc0] sm:$0xff] %vm1327, %v1287
      %1353 = vst.msk [vmem:[#allocation2 + $0xc8] sm:$0xff] %vm1327, %v1288
      %1354 = vst.msk [vmem:[#allocation2 + $0xd0] sm:$0xff] %vm1327, %v1289
      %1355 = vst.msk [vmem:[#allocation2 + $0xd8] sm:$0xff] %vm1327, %v1290
      %1356 = vst.msk [vmem:[#allocation2 + $0xe0] sm:$0xff] %vm1327, %v1291
      %1357 = vst.msk [vmem:[#allocation2 + $0xe8] sm:$0xff] %vm1327, %v1292
      %1358 = vst.msk [vmem:[#allocation2 + $0xf0] sm:$0xff] %vm1327, %v1293
      %1359 = vst.msk [vmem:[#allocation2 + $0xf8] sm:$0xff] %vm1327, %v1294
      %1360 = vst.msk [vmem:[#allocation2 + $0x100] sm:$0xff] %vm1327, %v1295
      %1361 = vst.msk [vmem:[#allocation2 + $0x108] sm:$0xff] %vm1327, %v1296
      %1362 = vst.msk [vmem:[#allocation2 + $0x110] sm:$0xff] %vm1327, %v1297
      %1363 = vst.msk [vmem:[#allocation2 + $0x118] sm:$0xff] %vm1327, %v1298
      %1364 = vst.msk [vmem:[#allocation2 + $0x120] sm:$0xff] %vm1327, %v1299
      %1365 = vst.msk [vmem:[#allocation2 + $0x128] sm:$0xff] %vm1327, %v1300
      %1366 = vst.msk [vmem:[#allocation2 + $0x130] sm:$0xff] %vm1327, %v1301
      %1367 = vst.msk [vmem:[#allocation2 + $0x138] sm:$0xff] %vm1327, %v1302
      %1368 = vst.msk [vmem:[#allocation2 + $0x140] sm:$0xff] %vm1327, %v1303
      %1369 = vst.msk [vmem:[#allocation2 + $0x148] sm:$0xff] %vm1327, %v1304
      %1370 = vst.msk [vmem:[#allocation2 + $0x150] sm:$0xff] %vm1327, %v1305
      %1371 = vst.msk [vmem:[#allocation2 + $0x158] sm:$0xff] %vm1327, %v1306
      %1372 = vst.msk [vmem:[#allocation2 + $0x160] sm:$0xff] %vm1327, %v1307
      %1373 = vst.msk [vmem:[#allocation2 + $0x168] sm:$0xff] %vm1327, %v1308
      %1374 = vst.msk [vmem:[#allocation2 + $0x170] sm:$0xff] %vm1327, %v1309
      %1375 = vst.msk [vmem:[#allocation2 + $0x178] sm:$0xff] %vm1327, %v1310
      %1376 = vst.msk [vmem:[#allocation2 + $0x180] sm:$0xff] %vm1327, %v1311
      %1377 = vst.msk [vmem:[#allocation2 + $0x188] sm:$0xff] %vm1327, %v1312
      %1378 = vst.msk [vmem:[#allocation2 + $0x190] sm:$0xff] %vm1327, %v1313
      %1379 = vst.msk [vmem:[#allocation2 + $0x198] sm:$0xff] %vm1327, %v1314
      %1380 = vst.msk [vmem:[#allocation2 + $0x1a0] sm:$0xff] %vm1327, %v1315
      %1381 = vst.msk [vmem:[#allocation2 + $0x1a8] sm:$0xff] %vm1327, %v1316
      %1382 = vst.msk [vmem:[#allocation2 + $0x1b0] sm:$0xff] %vm1327, %v1317
      %1383 = vst.msk [vmem:[#allocation2 + $0x1b8] sm:$0xff] %vm1327, %v1318
      %1384 = vst.msk [vmem:[#allocation2 + $0x1c0] sm:$0xff] %vm1327, %v1319
      %1385 = vst.msk [vmem:[#allocation2 + $0x1c8] sm:$0xff] %vm1327, %v1320
      %1386 = vst.msk [vmem:[#allocation2 + $0x1d0] sm:$0xff] %vm1327, %v1321
      %1387 = vst.msk [vmem:[#allocation2 + $0x1d8] sm:$0xff] %vm1327, %v1322
      %1388 = vst.msk [vmem:[#allocation2 + $0x1e0] sm:$0xff] %vm1327, %v1323
      %1389 = vst.msk [vmem:[#allocation2 + $0x1e8] sm:$0xff] %vm1327, %v1324
      %1390 = vst.msk [vmem:[#allocation2 + $0x1f0] sm:$0xff] %vm1327, %v1325
      %1391 = vst.msk [vmem:[#allocation2 + $0x1f8] sm:$0xff] %vm1327, %v1326
      // Predicated region
      $region41: #{fused_matmul.1} parent=35 // pred_check
        %p1392 = pneg %p309
      $region42: #{fused_matmul.1} parent=35 // pred_check_branch
        %1394 = sbr.rel (%p1392) target = $region44
      $region43: #{fused_matmul.1} parent=35 // pred_region
        %v1395 = vld [vmem:[#allocation2] sm:$0xff]
        %v1396 = vld [vmem:[#allocation2 + $0x8] sm:$0xff]
        %v1397 = vld [vmem:[#allocation2 + $0x10] sm:$0xff]
        %v1398 = vld [vmem:[#allocation2 + $0x18] sm:$0xff]
        %v1399 = vld [vmem:[#allocation2 + $0x20] sm:$0xff]
        %v1400 = vld [vmem:[#allocation2 + $0x28] sm:$0xff]
        %v1401 = vld [vmem:[#allocation2 + $0x30] sm:$0xff]
        %v1402 = vld [vmem:[#allocation2 + $0x38] sm:$0xff]
        %v1403 = vld [vmem:[#allocation2 + $0x40] sm:$0xff]
        %v1404 = vld [vmem:[#allocation2 + $0x48] sm:$0xff]
        %v1405 = vld [vmem:[#allocation2 + $0x50] sm:$0xff]
        %v1406 = vld [vmem:[#allocation2 + $0x58] sm:$0xff]
        %v1407 = vld [vmem:[#allocation2 + $0x60] sm:$0xff]
        %v1408 = vld [vmem:[#allocation2 + $0x68] sm:$0xff]
        %v1409 = vld [vmem:[#allocation2 + $0x70] sm:$0xff]
        %v1410 = vld [vmem:[#allocation2 + $0x78] sm:$0xff]
        %v1411 = vld [vmem:[#allocation2 + $0x80] sm:$0xff]
        %v1412 = vld [vmem:[#allocation2 + $0x88] sm:$0xff]
        %v1413 = vld [vmem:[#allocation2 + $0x90] sm:$0xff]
        %v1414 = vld [vmem:[#allocation2 + $0x98] sm:$0xff]
        %v1415 = vld [vmem:[#allocation2 + $0xa0] sm:$0xff]
        %v1416 = vld [vmem:[#allocation2 + $0xa8] sm:$0xff]
        %v1417 = vld [vmem:[#allocation2 + $0xb0] sm:$0xff]
        %v1418 = vld [vmem:[#allocation2 + $0xb8] sm:$0xff]
        %v1419 = vld [vmem:[#allocation2 + $0xc0] sm:$0xff]
        %v1420 = vld [vmem:[#allocation2 + $0xc8] sm:$0xff]
        %v1421 = vld [vmem:[#allocation2 + $0xd0] sm:$0xff]
        %v1422 = vld [vmem:[#allocation2 + $0xd8] sm:$0xff]
        %v1423 = vld [vmem:[#allocation2 + $0xe0] sm:$0xff]
        %v1424 = vld [vmem:[#allocation2 + $0xe8] sm:$0xff]
        %v1425 = vld [vmem:[#allocation2 + $0xf0] sm:$0xff]
        %v1426 = vld [vmem:[#allocation2 + $0xf8] sm:$0xff]
        %v1427 = vld [vmem:[#allocation2 + $0x100] sm:$0xff]
        %v1428 = vld [vmem:[#allocation2 + $0x108] sm:$0xff]
        %v1429 = vld [vmem:[#allocation2 + $0x110] sm:$0xff]
        %v1430 = vld [vmem:[#allocation2 + $0x118] sm:$0xff]
        %v1431 = vld [vmem:[#allocation2 + $0x120] sm:$0xff]
        %v1432 = vld [vmem:[#allocation2 + $0x128] sm:$0xff]
        %v1433 = vld [vmem:[#allocation2 + $0x130] sm:$0xff]
        %v1434 = vld [vmem:[#allocation2 + $0x138] sm:$0xff]
        %v1435 = vld [vmem:[#allocation2 + $0x140] sm:$0xff]
        %v1436 = vld [vmem:[#allocation2 + $0x148] sm:$0xff]
        %v1437 = vld [vmem:[#allocation2 + $0x150] sm:$0xff]
        %v1438 = vld [vmem:[#allocation2 + $0x158] sm:$0xff]
        %v1439 = vld [vmem:[#allocation2 + $0x160] sm:$0xff]
        %v1440 = vld [vmem:[#allocation2 + $0x168] sm:$0xff]
        %v1441 = vld [vmem:[#allocation2 + $0x170] sm:$0xff]
        %v1442 = vld [vmem:[#allocation2 + $0x178] sm:$0xff]
        %v1443 = vld [vmem:[#allocation2 + $0x180] sm:$0xff]
        %v1444 = vld [vmem:[#allocation2 + $0x188] sm:$0xff]
        %v1445 = vld [vmem:[#allocation2 + $0x190] sm:$0xff]
        %v1446 = vld [vmem:[#allocation2 + $0x198] sm:$0xff]
        %v1447 = vld [vmem:[#allocation2 + $0x1a0] sm:$0xff]
        %v1448 = vld [vmem:[#allocation2 + $0x1a8] sm:$0xff]
        %v1449 = vld [vmem:[#allocation2 + $0x1b0] sm:$0xff]
        %v1450 = vld [vmem:[#allocation2 + $0x1b8] sm:$0xff]
        %v1451 = vld [vmem:[#allocation2 + $0x1c0] sm:$0xff]
        %v1452 = vld [vmem:[#allocation2 + $0x1c8] sm:$0xff]
        %v1453 = vld [vmem:[#allocation2 + $0x1d0] sm:$0xff]
        %v1454 = vld [vmem:[#allocation2 + $0x1d8] sm:$0xff]
        %v1455 = vld [vmem:[#allocation2 + $0x1e0] sm:$0xff]
        %v1456 = vld [vmem:[#allocation2 + $0x1e8] sm:$0xff]
        %v1457 = vld [vmem:[#allocation2 + $0x1f0] sm:$0xff]
        %v1458 = vld [vmem:[#allocation2 + $0x1f8] sm:$0xff]
        %v1459 = vld [vmem:[%s295] sm:$0x1]
        %v1461 = vlaneseq
        %v1462 = vshrl.u32 %v1461, 7
        %v1463 = vsub.s32 0, %v1462
        %v1464 = vrot.slane %v1459, %v1463
        %v1466 = vmul.f32 %v1395, %v1464
        %v1467 = vmul.f32 %v1396, %v1464
        %v1468 = vmul.f32 %v1397, %v1464
        %v1469 = vmul.f32 %v1398, %v1464
        %v1470 = vmul.f32 %v1399, %v1464
        %v1471 = vmul.f32 %v1400, %v1464
        %v1472 = vmul.f32 %v1401, %v1464
        %v1473 = vmul.f32 %v1402, %v1464
        %v1474 = vmul.f32 %v1403, %v1464
        %v1475 = vmul.f32 %v1404, %v1464
        %v1476 = vmul.f32 %v1405, %v1464
        %v1477 = vmul.f32 %v1406, %v1464
        %v1478 = vmul.f32 %v1407, %v1464
        %v1479 = vmul.f32 %v1408, %v1464
        %v1480 = vmul.f32 %v1409, %v1464
        %v1481 = vmul.f32 %v1410, %v1464
        %v1482 = vmul.f32 %v1411, %v1464
        %v1483 = vmul.f32 %v1412, %v1464
        %v1484 = vmul.f32 %v1413, %v1464
        %v1485 = vmul.f32 %v1414, %v1464
        %v1486 = vmul.f32 %v1415, %v1464
        %v1487 = vmul.f32 %v1416, %v1464
        %v1488 = vmul.f32 %v1417, %v1464
        %v1489 = vmul.f32 %v1418, %v1464
        %v1490 = vmul.f32 %v1419, %v1464
        %v1491 = vmul.f32 %v1420, %v1464
        %v1492 = vmul.f32 %v1421, %v1464
        %v1493 = vmul.f32 %v1422, %v1464
        %v1494 = vmul.f32 %v1423, %v1464
        %v1495 = vmul.f32 %v1424, %v1464
        %v1496 = vmul.f32 %v1425, %v1464
        %v1497 = vmul.f32 %v1426, %v1464
        %v1498 = vmul.f32 %v1427, %v1464
        %v1499 = vmul.f32 %v1428, %v1464
        %v1500 = vmul.f32 %v1429, %v1464
        %v1501 = vmul.f32 %v1430, %v1464
        %v1502 = vmul.f32 %v1431, %v1464
        %v1503 = vmul.f32 %v1432, %v1464
        %v1504 = vmul.f32 %v1433, %v1464
        %v1505 = vmul.f32 %v1434, %v1464
        %v1506 = vmul.f32 %v1435, %v1464
        %v1507 = vmul.f32 %v1436, %v1464
        %v1508 = vmul.f32 %v1437, %v1464
        %v1509 = vmul.f32 %v1438, %v1464
        %v1510 = vmul.f32 %v1439, %v1464
        %v1511 = vmul.f32 %v1440, %v1464
        %v1512 = vmul.f32 %v1441, %v1464
        %v1513 = vmul.f32 %v1442, %v1464
        %v1514 = vmul.f32 %v1443, %v1464
        %v1515 = vmul.f32 %v1444, %v1464
        %v1516 = vmul.f32 %v1445, %v1464
        %v1517 = vmul.f32 %v1446, %v1464
        %v1518 = vmul.f32 %v1447, %v1464
        %v1519 = vmul.f32 %v1448, %v1464
        %v1520 = vmul.f32 %v1449, %v1464
        %v1521 = vmul.f32 %v1450, %v1464
        %v1522 = vmul.f32 %v1451, %v1464
        %v1523 = vmul.f32 %v1452, %v1464
        %v1524 = vmul.f32 %v1453, %v1464
        %v1525 = vmul.f32 %v1454, %v1464
        %v1526 = vmul.f32 %v1455, %v1464
        %v1527 = vmul.f32 %v1456, %v1464
        %v1528 = vmul.f32 %v1457, %v1464
        %v1529 = vmul.f32 %v1458, %v1464
        %v1530 = vld [vmem:[%s298] sm:$0x1]
        %v1532 = vlaneseq
        %v1533 = vshrl.u32 %v1532, 7
        %v1534 = vsub.s32 0, %v1533
        %v1535 = vrot.slane %v1530, %v1534
        %v1537 = vadd.f32 %v1466, %v1535
        %v1538 = vadd.f32 %v1467, %v1535
        %v1539 = vadd.f32 %v1468, %v1535
        %v1540 = vadd.f32 %v1469, %v1535
        %v1541 = vadd.f32 %v1470, %v1535
        %v1542 = vadd.f32 %v1471, %v1535
        %v1543 = vadd.f32 %v1472, %v1535
        %v1544 = vadd.f32 %v1473, %v1535
        %v1545 = vadd.f32 %v1474, %v1535
        %v1546 = vadd.f32 %v1475, %v1535
        %v1547 = vadd.f32 %v1476, %v1535
        %v1548 = vadd.f32 %v1477, %v1535
        %v1549 = vadd.f32 %v1478, %v1535
        %v1550 = vadd.f32 %v1479, %v1535
        %v1551 = vadd.f32 %v1480, %v1535
        %v1552 = vadd.f32 %v1481, %v1535
        %v1553 = vadd.f32 %v1482, %v1535
        %v1554 = vadd.f32 %v1483, %v1535
        %v1555 = vadd.f32 %v1484, %v1535
        %v1556 = vadd.f32 %v1485, %v1535
        %v1557 = vadd.f32 %v1486, %v1535
        %v1558 = vadd.f32 %v1487, %v1535
        %v1559 = vadd.f32 %v1488, %v1535
        %v1560 = vadd.f32 %v1489, %v1535
        %v1561 = vadd.f32 %v1490, %v1535
        %v1562 = vadd.f32 %v1491, %v1535
        %v1563 = vadd.f32 %v1492, %v1535
        %v1564 = vadd.f32 %v1493, %v1535
        %v1565 = vadd.f32 %v1494, %v1535
        %v1566 = vadd.f32 %v1495, %v1535
        %v1567 = vadd.f32 %v1496, %v1535
        %v1568 = vadd.f32 %v1497, %v1535
        %v1569 = vadd.f32 %v1498, %v1535
        %v1570 = vadd.f32 %v1499, %v1535
        %v1571 = vadd.f32 %v1500, %v1535
        %v1572 = vadd.f32 %v1501, %v1535
        %v1573 = vadd.f32 %v1502, %v1535
        %v1574 = vadd.f32 %v1503, %v1535
        %v1575 = vadd.f32 %v1504, %v1535
        %v1576 = vadd.f32 %v1505, %v1535
        %v1577 = vadd.f32 %v1506, %v1535
        %v1578 = vadd.f32 %v1507, %v1535
        %v1579 = vadd.f32 %v1508, %v1535
        %v1580 = vadd.f32 %v1509, %v1535
        %v1581 = vadd.f32 %v1510, %v1535
        %v1582 = vadd.f32 %v1511, %v1535
        %v1583 = vadd.f32 %v1512, %v1535
        %v1584 = vadd.f32 %v1513, %v1535
        %v1585 = vadd.f32 %v1514, %v1535
        %v1586 = vadd.f32 %v1515, %v1535
        %v1587 = vadd.f32 %v1516, %v1535
        %v1588 = vadd.f32 %v1517, %v1535
        %v1589 = vadd.f32 %v1518, %v1535
        %v1590 = vadd.f32 %v1519, %v1535
        %v1591 = vadd.f32 %v1520, %v1535
        %v1592 = vadd.f32 %v1521, %v1535
        %v1593 = vadd.f32 %v1522, %v1535
        %v1594 = vadd.f32 %v1523, %v1535
        %v1595 = vadd.f32 %v1524, %v1535
        %v1596 = vadd.f32 %v1525, %v1535
        %v1597 = vadd.f32 %v1526, %v1535
        %v1598 = vadd.f32 %v1527, %v1535
        %v1599 = vadd.f32 %v1528, %v1535
        %v1600 = vadd.f32 %v1529, %v1535
        %v1601 = vmax.f32 %v1537, 0.0
        %v1602 = vmax.f32 %v1538, 0.0
        %v1603 = vmax.f32 %v1539, 0.0
        %v1604 = vmax.f32 %v1540, 0.0
        %v1605 = vmax.f32 %v1541, 0.0
        %v1606 = vmax.f32 %v1542, 0.0
        %v1607 = vmax.f32 %v1543, 0.0
        %v1608 = vmax.f32 %v1544, 0.0
        %v1609 = vmax.f32 %v1545, 0.0
        %v1610 = vmax.f32 %v1546, 0.0
        %v1611 = vmax.f32 %v1547, 0.0
        %v1612 = vmax.f32 %v1548, 0.0
        %v1613 = vmax.f32 %v1549, 0.0
        %v1614 = vmax.f32 %v1550, 0.0
        %v1615 = vmax.f32 %v1551, 0.0
        %v1616 = vmax.f32 %v1552, 0.0
        %v1617 = vmax.f32 %v1553, 0.0
        %v1618 = vmax.f32 %v1554, 0.0
        %v1619 = vmax.f32 %v1555, 0.0
        %v1620 = vmax.f32 %v1556, 0.0
        %v1621 = vmax.f32 %v1557, 0.0
        %v1622 = vmax.f32 %v1558, 0.0
        %v1623 = vmax.f32 %v1559, 0.0
        %v1624 = vmax.f32 %v1560, 0.0
        %v1625 = vmax.f32 %v1561, 0.0
        %v1626 = vmax.f32 %v1562, 0.0
        %v1627 = vmax.f32 %v1563, 0.0
        %v1628 = vmax.f32 %v1564, 0.0
        %v1629 = vmax.f32 %v1565, 0.0
        %v1630 = vmax.f32 %v1566, 0.0
        %v1631 = vmax.f32 %v1567, 0.0
        %v1632 = vmax.f32 %v1568, 0.0
        %v1633 = vmax.f32 %v1569, 0.0
        %v1634 = vmax.f32 %v1570, 0.0
        %v1635 = vmax.f32 %v1571, 0.0
        %v1636 = vmax.f32 %v1572, 0.0
        %v1637 = vmax.f32 %v1573, 0.0
        %v1638 = vmax.f32 %v1574, 0.0
        %v1639 = vmax.f32 %v1575, 0.0
        %v1640 = vmax.f32 %v1576, 0.0
        %v1641 = vmax.f32 %v1577, 0.0
        %v1642 = vmax.f32 %v1578, 0.0
        %v1643 = vmax.f32 %v1579, 0.0
        %v1644 = vmax.f32 %v1580, 0.0
        %v1645 = vmax.f32 %v1581, 0.0
        %v1646 = vmax.f32 %v1582, 0.0
        %v1647 = vmax.f32 %v1583, 0.0
        %v1648 = vmax.f32 %v1584, 0.0
        %v1649 = vmax.f32 %v1585, 0.0
        %v1650 = vmax.f32 %v1586, 0.0
        %v1651 = vmax.f32 %v1587, 0.0
        %v1652 = vmax.f32 %v1588, 0.0
        %v1653 = vmax.f32 %v1589, 0.0
        %v1654 = vmax.f32 %v1590, 0.0
        %v1655 = vmax.f32 %v1591, 0.0
        %v1656 = vmax.f32 %v1592, 0.0
        %v1657 = vmax.f32 %v1593, 0.0
        %v1658 = vmax.f32 %v1594, 0.0
        %v1659 = vmax.f32 %v1595, 0.0
        %v1660 = vmax.f32 %v1596, 0.0
        %v1661 = vmax.f32 %v1597, 0.0
        %v1662 = vmax.f32 %v1598, 0.0
        %v1663 = vmax.f32 %v1599, 0.0
        %v1664 = vmax.f32 %v1600, 0.0
        %v1665 = vpack.c.bf16 %v1602, %v1601
        %v1666 = vpack.c.bf16 %v1604, %v1603
        %v1667 = vpack.c.bf16 %v1606, %v1605
        %v1668 = vpack.c.bf16 %v1608, %v1607
        %v1669 = vpack.c.bf16 %v1610, %v1609
        %v1670 = vpack.c.bf16 %v1612, %v1611
        %v1671 = vpack.c.bf16 %v1614, %v1613
        %v1672 = vpack.c.bf16 %v1616, %v1615
        %v1673 = vpack.c.bf16 %v1618, %v1617
        %v1674 = vpack.c.bf16 %v1620, %v1619
        %v1675 = vpack.c.bf16 %v1622, %v1621
        %v1676 = vpack.c.bf16 %v1624, %v1623
        %v1677 = vpack.c.bf16 %v1626, %v1625
        %v1678 = vpack.c.bf16 %v1628, %v1627
        %v1679 = vpack.c.bf16 %v1630, %v1629
        %v1680 = vpack.c.bf16 %v1632, %v1631
        %v1681 = vpack.c.bf16 %v1634, %v1633
        %v1682 = vpack.c.bf16 %v1636, %v1635
        %v1683 = vpack.c.bf16 %v1638, %v1637
        %v1684 = vpack.c.bf16 %v1640, %v1639
        %v1685 = vpack.c.bf16 %v1642, %v1641
        %v1686 = vpack.c.bf16 %v1644, %v1643
        %v1687 = vpack.c.bf16 %v1646, %v1645
        %v1688 = vpack.c.bf16 %v1648, %v1647
        %v1689 = vpack.c.bf16 %v1650, %v1649
        %v1690 = vpack.c.bf16 %v1652, %v1651
        %v1691 = vpack.c.bf16 %v1654, %v1653
        %v1692 = vpack.c.bf16 %v1656, %v1655
        %v1693 = vpack.c.bf16 %v1658, %v1657
        %v1694 = vpack.c.bf16 %v1660, %v1659
        %v1695 = vpack.c.bf16 %v1662, %v1661
        %v1696 = vpack.c.bf16 %v1664, %v1663
        %v1729 = vunpack.c.l.b16 %v1665
        %v1730 = vunpack.c.h.b16 %v1665
        %v1731 = vunpack.c.l.b16 %v1666
        %v1732 = vunpack.c.h.b16 %v1666
        %v1733 = vunpack.c.l.b16 %v1667
        %v1734 = vunpack.c.h.b16 %v1667
        %v1735 = vunpack.c.l.b16 %v1668
        %v1736 = vunpack.c.h.b16 %v1668
        %v1737 = vunpack.c.l.b16 %v1669
        %v1738 = vunpack.c.h.b16 %v1669
        %v1739 = vunpack.c.l.b16 %v1670
        %v1740 = vunpack.c.h.b16 %v1670
        %v1741 = vunpack.c.l.b16 %v1671
        %v1742 = vunpack.c.h.b16 %v1671
        %v1743 = vunpack.c.l.b16 %v1672
        %v1744 = vunpack.c.h.b16 %v1672
        %v1745 = vunpack.c.l.b16 %v1673
        %v1746 = vunpack.c.h.b16 %v1673
        %v1747 = vunpack.c.l.b16 %v1674
        %v1748 = vunpack.c.h.b16 %v1674
        %v1749 = vunpack.c.l.b16 %v1675
        %v1750 = vunpack.c.h.b16 %v1675
        %v1751 = vunpack.c.l.b16 %v1676
        %v1752 = vunpack.c.h.b16 %v1676
        %v1753 = vunpack.c.l.b16 %v1677
        %v1754 = vunpack.c.h.b16 %v1677
        %v1755 = vunpack.c.l.b16 %v1678
        %v1756 = vunpack.c.h.b16 %v1678
        %v1757 = vunpack.c.l.b16 %v1679
        %v1758 = vunpack.c.h.b16 %v1679
        %v1759 = vunpack.c.l.b16 %v1680
        %v1760 = vunpack.c.h.b16 %v1680
        %v1761 = vunpack.c.l.b16 %v1681
        %v1762 = vunpack.c.h.b16 %v1681
        %v1763 = vunpack.c.l.b16 %v1682
        %v1764 = vunpack.c.h.b16 %v1682
        %v1765 = vunpack.c.l.b16 %v1683
        %v1766 = vunpack.c.h.b16 %v1683
        %v1767 = vunpack.c.l.b16 %v1684
        %v1768 = vunpack.c.h.b16 %v1684
        %v1769 = vunpack.c.l.b16 %v1685
        %v1770 = vunpack.c.h.b16 %v1685
        %v1771 = vunpack.c.l.b16 %v1686
        %v1772 = vunpack.c.h.b16 %v1686
        %v1773 = vunpack.c.l.b16 %v1687
        %v1774 = vunpack.c.h.b16 %v1687
        %v1775 = vunpack.c.l.b16 %v1688
        %v1776 = vunpack.c.h.b16 %v1688
        %v1777 = vunpack.c.l.b16 %v1689
        %v1778 = vunpack.c.h.b16 %v1689
        %v1779 = vunpack.c.l.b16 %v1690
        %v1780 = vunpack.c.h.b16 %v1690
        %v1781 = vunpack.c.l.b16 %v1691
        %v1782 = vunpack.c.h.b16 %v1691
        %v1783 = vunpack.c.l.b16 %v1692
        %v1784 = vunpack.c.h.b16 %v1692
        %v1785 = vunpack.c.l.b16 %v1693
        %v1786 = vunpack.c.h.b16 %v1693
        %v1787 = vunpack.c.l.b16 %v1694
        %v1788 = vunpack.c.h.b16 %v1694
        %v1789 = vunpack.c.l.b16 %v1695
        %v1790 = vunpack.c.h.b16 %v1695
        %v1791 = vunpack.c.l.b16 %v1696
        %v1792 = vunpack.c.h.b16 %v1696
        %v1793 = vpack.c.b16 %v1729, %v1729
        %v1794 = vpack.c.b16 %v1730, %v1730
        %v1795 = vpack.c.b16 %v1731, %v1731
        %v1796 = vpack.c.b16 %v1732, %v1732
        %v1797 = vpack.c.b16 %v1733, %v1733
        %v1798 = vpack.c.b16 %v1734, %v1734
        %v1799 = vpack.c.b16 %v1735, %v1735
        %v1800 = vpack.c.b16 %v1736, %v1736
        %v1801 = vpack.c.b16 %v1737, %v1737
        %v1802 = vpack.c.b16 %v1738, %v1738
        %v1803 = vpack.c.b16 %v1739, %v1739
        %v1804 = vpack.c.b16 %v1740, %v1740
        %v1805 = vpack.c.b16 %v1741, %v1741
        %v1806 = vpack.c.b16 %v1742, %v1742
        %v1807 = vpack.c.b16 %v1743, %v1743
        %v1808 = vpack.c.b16 %v1744, %v1744
        %v1809 = vpack.c.b16 %v1745, %v1745
        %v1810 = vpack.c.b16 %v1746, %v1746
        %v1811 = vpack.c.b16 %v1747, %v1747
        %v1812 = vpack.c.b16 %v1748, %v1748
        %v1813 = vpack.c.b16 %v1749, %v1749
        %v1814 = vpack.c.b16 %v1750, %v1750
        %v1815 = vpack.c.b16 %v1751, %v1751
        %v1816 = vpack.c.b16 %v1752, %v1752
        %v1817 = vpack.c.b16 %v1753, %v1753
        %v1818 = vpack.c.b16 %v1754, %v1754
        %v1819 = vpack.c.b16 %v1755, %v1755
        %v1820 = vpack.c.b16 %v1756, %v1756
        %v1821 = vpack.c.b16 %v1757, %v1757
        %v1822 = vpack.c.b16 %v1758, %v1758
        %v1823 = vpack.c.b16 %v1759, %v1759
        %v1824 = vpack.c.b16 %v1760, %v1760
        %v1825 = vpack.c.b16 %v1761, %v1761
        %v1826 = vpack.c.b16 %v1762, %v1762
        %v1827 = vpack.c.b16 %v1763, %v1763
        %v1828 = vpack.c.b16 %v1764, %v1764
        %v1829 = vpack.c.b16 %v1765, %v1765
        %v1830 = vpack.c.b16 %v1766, %v1766
        %v1831 = vpack.c.b16 %v1767, %v1767
        %v1832 = vpack.c.b16 %v1768, %v1768
        %v1833 = vpack.c.b16 %v1769, %v1769
        %v1834 = vpack.c.b16 %v1770, %v1770
        %v1835 = vpack.c.b16 %v1771, %v1771
        %v1836 = vpack.c.b16 %v1772, %v1772
        %v1837 = vpack.c.b16 %v1773, %v1773
        %v1838 = vpack.c.b16 %v1774, %v1774
        %v1839 = vpack.c.b16 %v1775, %v1775
        %v1840 = vpack.c.b16 %v1776, %v1776
        %v1841 = vpack.c.b16 %v1777, %v1777
        %v1842 = vpack.c.b16 %v1778, %v1778
        %v1843 = vpack.c.b16 %v1779, %v1779
        %v1844 = vpack.c.b16 %v1780, %v1780
        %v1845 = vpack.c.b16 %v1781, %v1781
        %v1846 = vpack.c.b16 %v1782, %v1782
        %v1847 = vpack.c.b16 %v1783, %v1783
        %v1848 = vpack.c.b16 %v1784, %v1784
        %v1849 = vpack.c.b16 %v1785, %v1785
        %v1850 = vpack.c.b16 %v1786, %v1786
        %v1851 = vpack.c.b16 %v1787, %v1787
        %v1852 = vpack.c.b16 %v1788, %v1788
        %v1853 = vpack.c.b16 %v1789, %v1789
        %v1854 = vpack.c.b16 %v1790, %v1790
        %v1855 = vpack.c.b16 %v1791, %v1791
        %v1856 = vpack.c.b16 %v1792, %v1792
        %vm1921 = vcmask 519168
        %1922 = vst.msk [vmem:[%s306] sm:$0xf] %vm1921, %v1793
        %1923 = vst.msk [vmem:[%s306 + $0x4] sm:$0xf] %vm1921, %v1794
        %1924 = vst.msk [vmem:[%s306 + $0x8] sm:$0xf] %vm1921, %v1795
        %1925 = vst.msk [vmem:[%s306 + $0xc] sm:$0xf] %vm1921, %v1796
        %1926 = vst.msk [vmem:[%s306 + $0x10] sm:$0xf] %vm1921, %v1797
        %1927 = vst.msk [vmem:[%s306 + $0x14] sm:$0xf] %vm1921, %v1798
        %1928 = vst.msk [vmem:[%s306 + $0x18] sm:$0xf] %vm1921, %v1799
        %1929 = vst.msk [vmem:[%s306 + $0x1c] sm:$0xf] %vm1921, %v1800
        %1930 = vst.msk [vmem:[%s306 + $0x20] sm:$0xf] %vm1921, %v1801
        %1931 = vst.msk [vmem:[%s306 + $0x24] sm:$0xf] %vm1921, %v1802
        %1932 = vst.msk [vmem:[%s306 + $0x28] sm:$0xf] %vm1921, %v1803
        %1933 = vst.msk [vmem:[%s306 + $0x2c] sm:$0xf] %vm1921, %v1804
        %1934 = vst.msk [vmem:[%s306 + $0x30] sm:$0xf] %vm1921, %v1805
        %1935 = vst.msk [vmem:[%s306 + $0x34] sm:$0xf] %vm1921, %v1806
        %1936 = vst.msk [vmem:[%s306 + $0x38] sm:$0xf] %vm1921, %v1807
        %1937 = vst.msk [vmem:[%s306 + $0x3c] sm:$0xf] %vm1921, %v1808
        %1938 = vst.msk [vmem:[%s306 + $0x40] sm:$0xf] %vm1921, %v1809
        %1939 = vst.msk [vmem:[%s306 + $0x44] sm:$0xf] %vm1921, %v1810
        %1940 = vst.msk [vmem:[%s306 + $0x48] sm:$0xf] %vm1921, %v1811
        %1941 = vst.msk [vmem:[%s306 + $0x4c] sm:$0xf] %vm1921, %v1812
        %1942 = vst.msk [vmem:[%s306 + $0x50] sm:$0xf] %vm1921, %v1813
        %1943 = vst.msk [vmem:[%s306 + $0x54] sm:$0xf] %vm1921, %v1814
        %1944 = vst.msk [vmem:[%s306 + $0x58] sm:$0xf] %vm1921, %v1815
        %1945 = vst.msk [vmem:[%s306 + $0x5c] sm:$0xf] %vm1921, %v1816
        %1946 = vst.msk [vmem:[%s306 + $0x60] sm:$0xf] %vm1921, %v1817
        %1947 = vst.msk [vmem:[%s306 + $0x64] sm:$0xf] %vm1921, %v1818
        %1948 = vst.msk [vmem:[%s306 + $0x68] sm:$0xf] %vm1921, %v1819
        %1949 = vst.msk [vmem:[%s306 + $0x6c] sm:$0xf] %vm1921, %v1820
        %1950 = vst.msk [vmem:[%s306 + $0x70] sm:$0xf] %vm1921, %v1821
        %1951 = vst.msk [vmem:[%s306 + $0x74] sm:$0xf] %vm1921, %v1822
        %1952 = vst.msk [vmem:[%s306 + $0x78] sm:$0xf] %vm1921, %v1823
        %1953 = vst.msk [vmem:[%s306 + $0x7c] sm:$0xf] %vm1921, %v1824
        %1954 = vst.msk [vmem:[%s306 + $0x80] sm:$0xf] %vm1921, %v1825
        %1955 = vst.msk [vmem:[%s306 + $0x84] sm:$0xf] %vm1921, %v1826
        %1956 = vst.msk [vmem:[%s306 + $0x88] sm:$0xf] %vm1921, %v1827
        %1957 = vst.msk [vmem:[%s306 + $0x8c] sm:$0xf] %vm1921, %v1828
        %1958 = vst.msk [vmem:[%s306 + $0x90] sm:$0xf] %vm1921, %v1829
        %1959 = vst.msk [vmem:[%s306 + $0x94] sm:$0xf] %vm1921, %v1830
        %1960 = vst.msk [vmem:[%s306 + $0x98] sm:$0xf] %vm1921, %v1831
        %1961 = vst.msk [vmem:[%s306 + $0x9c] sm:$0xf] %vm1921, %v1832
        %1962 = vst.msk [vmem:[%s306 + $0xa0] sm:$0xf] %vm1921, %v1833
        %1963 = vst.msk [vmem:[%s306 + $0xa4] sm:$0xf] %vm1921, %v1834
        %1964 = vst.msk [vmem:[%s306 + $0xa8] sm:$0xf] %vm1921, %v1835
        %1965 = vst.msk [vmem:[%s306 + $0xac] sm:$0xf] %vm1921, %v1836
        %1966 = vst.msk [vmem:[%s306 + $0xb0] sm:$0xf] %vm1921, %v1837
        %1967 = vst.msk [vmem:[%s306 + $0xb4] sm:$0xf] %vm1921, %v1838
        %1968 = vst.msk [vmem:[%s306 + $0xb8] sm:$0xf] %vm1921, %v1839
        %1969 = vst.msk [vmem:[%s306 + $0xbc] sm:$0xf] %vm1921, %v1840
        %1970 = vst.msk [vmem:[%s306 + $0xc0] sm:$0xf] %vm1921, %v1841
        %1971 = vst.msk [vmem:[%s306 + $0xc4] sm:$0xf] %vm1921, %v1842
        %1972 = vst.msk [vmem:[%s306 + $0xc8] sm:$0xf] %vm1921, %v1843
        %1973 = vst.msk [vmem:[%s306 + $0xcc] sm:$0xf] %vm1921, %v1844
        %1974 = vst.msk [vmem:[%s306 + $0xd0] sm:$0xf] %vm1921, %v1845
        %1975 = vst.msk [vmem:[%s306 + $0xd4] sm:$0xf] %vm1921, %v1846
        %1976 = vst.msk [vmem:[%s306 + $0xd8] sm:$0xf] %vm1921, %v1847
        %1977 = vst.msk [vmem:[%s306 + $0xdc] sm:$0xf] %vm1921, %v1848
        %1978 = vst.msk [vmem:[%s306 + $0xe0] sm:$0xf] %vm1921, %v1849
        %1979 = vst.msk [vmem:[%s306 + $0xe4] sm:$0xf] %vm1921, %v1850
        %1980 = vst.msk [vmem:[%s306 + $0xe8] sm:$0xf] %vm1921, %v1851
        %1981 = vst.msk [vmem:[%s306 + $0xec] sm:$0xf] %vm1921, %v1852
        %1982 = vst.msk [vmem:[%s306 + $0xf0] sm:$0xf] %vm1921, %v1853
        %1983 = vst.msk [vmem:[%s306 + $0xf4] sm:$0xf] %vm1921, %v1854
        %1984 = vst.msk [vmem:[%s306 + $0xf8] sm:$0xf] %vm1921, %v1855
        %1985 = vst.msk [vmem:[%s306 + $0xfc] sm:$0xf] %vm1921, %v1856
      $region44: #{fused_matmul.1} parent=35 // pred_fallthru
        _
      %s1986 = smul.u32 64, %s20
      %p1987 = scmp.lt.s32.totalorder %s1986, 511
      %s1988 = scalar_select %p1987, %s1986, 511
      %p1989 = scmp.lt.s32.totalorder %s21, 0
      %s1990 = scalar_select %p1989, %s21, 0
      %s1991 = sadd.s32 %s1990, %s1988
      %s1992 = smul.addr %s1991, 4
      %s1993 = scalar_lea.vmem %s4, %s1992
      // Predicated region
      $region45: #{fused_matmul.1} parent=35 // pred_check
        %p1994 = pneg %p162
      $region46: #{fused_matmul.1} parent=35 // pred_check_branch
        %1996 = sbr.rel (%p1994) target = $region48
      $region47: #{fused_matmul.1} parent=35 // pred_region
        %s1997 = smul.u32 64, %s20
      $region48: #{fused_matmul.1} parent=35 // pred_fallthru
        _
    $region36: #{fused_matmul.1} parent=5 // pred_fallthru
      _
    %p1998 = scmp.le.s32.totalorder 2, %s10
    // Predicated region
    $region49: #{fused_matmul.1} parent=5 // pred_check
      %p1999 = pneg %p1998
    $region50: #{fused_matmul.1} parent=5 // pred_check_branch
      %2001 = sbr.rel (%p1999) target = $region52
    $region51: #{fused_matmul.1} parent=5 // pred_region
      %s2002 = ssub.s32 %s10, 2
      // Predicated region
      $region53: #{fused_matmul.1} parent=51 // pred_check
        %p2003 = pneg %p168
      $region54: #{fused_matmul.1} parent=51 // pred_check_branch
        %2005 = sbr.rel (%p2003) target = $region56
      $region55: #{fused_matmul.1} parent=51 // pred_region
        %s2006 = smul.u32 64, %s23
        %p2007 = scmp.lt.s32.totalorder %s2006, 511
        %s2008 = scalar_select %p2007, %s2006, 511
        %p2009 = scmp.lt.s32.totalorder %s24, 0
        %s2010 = scalar_select %p2009, %s24, 0
        %s2011 = sadd.s32 %s2010, %s2008
        %s2012 = smul.addr %s2011, 4
        %s2013 = scalar_lea.vmem %s4, %s2012
      $region56: #{fused_matmul.1} parent=51 // pred_fallthru
        _
    $region52: #{fused_matmul.1} parent=5 // pred_fallthru
      _
  $region6: #{fused_matmul.1} parent=0 // loop_footer
    %s14 = sadd.s32 1, %s10
  $region7: #{fused_matmul.1} parent=0 // loop_footer_branch
    %9 = sbr.rel target = $region3
  $region8: #{fused_matmul.1} parent=0 // loop_exit
    _

</llo_original>
